<compile_context>
chip_gen: v7x
topology: tpu7x:2x2x1
jax: 0.10.0
libtpu: 0.0.40
codegen_flags: <defaults>
</compile_context>

<pallas_src>
import math
import numpy as np
import jax
import jax.numpy as jnp
from jax.experimental import pallas as pl
from jax.experimental.pallas import tpu as pltpu


def _round_up(x, m):
    return ((x + m - 1) // m) * m


# --------------------------------------------------------------------------------------
# Cartesian -> n-spherical coordinates (exact re-implementation of to_spherical)
# --------------------------------------------------------------------------------------
def to_spherical(coords):
    # coords: (bs, npoint, n)
    r = jnp.linalg.norm(coords, axis=-1, keepdims=True)                      # (bs, npoint, 1)
    sq = coords ** 2
    # phi_norms[..., i] == || coords[..., i:] ||  (same as the tril/flip trick in torch)
    phi_norms = jnp.sqrt(jnp.cumsum(sq[..., ::-1], axis=-1)[..., ::-1])
    eps = 1e-7
    phi = jnp.arccos(jnp.clip(coords[..., :-2] / phi_norms[..., :-2], -1 + eps, 1 - eps))
    a = jnp.arccos(jnp.clip(coords[..., -2:-1] / phi_norms[..., -2:-1], -1 + eps, 1 - eps))
    phi_final = a + (2.0 * math.pi - 2.0 * a) * (coords[..., -1:] < 0).astype(coords.dtype)
    return jnp.transpose(r, (0, 2, 1)), jnp.concatenate([phi, phi_final], axis=-1)


# --------------------------------------------------------------------------------------
# Precompute (numpy): Clenshaw-Curtis quadrature + orthonormal associated Legendre
# (equivalent of torch_harmonics.RealSHT internals for grid='equiangular')
# --------------------------------------------------------------------------------------
def clenshaw_curtis(n):
    tj = np.pi * np.arange(n) / (n - 1)
    x = np.cos(tj)
    w = np.zeros(n)
    for j in range(n):
        s = 0.0
        for kk in range(1, (n - 1) // 2 + 1):
            b = 1.0 if 2 * kk == (n - 1) else 2.0
            s += b / (4.0 * kk * kk - 1.0) * np.cos(2.0 * kk * tj[j])
        w[j] = 2.0 / (n - 1) * (1.0 - s)
    w[0] *= 0.5
    w[-1] *= 0.5
    return x, w


def legendre_normalized(mmax, lmax, cost):
    nlat = cost.shape[0]
    sint = np.sqrt(np.clip(1.0 - cost ** 2, 0.0, None))
    P = np.zeros((mmax, lmax, nlat))
    pmm = np.full(nlat, np.sqrt(1.0 / (4.0 * np.pi)))
    for m in range(mmax):
        if m > 0:
            pmm = -np.sqrt((2.0 * m + 1.0) / (2.0 * m)) * sint * pmm        # Condon-Shortley
        if m < lmax:
            P[m, m] = pmm
        if m + 1 < lmax:
            plm1 = np.sqrt(2.0 * m + 3.0) * cost * pmm
            P[m, m + 1] = plm1
            plm2 = pmm
            for l in range(m + 2, lmax):
                pl_ = (np.sqrt((2.0 * l + 1.0) / (l * l - m * m)) *
                       (np.sqrt(2.0 * l - 1.0) * cost * plm1 -
                        np.sqrt(((l - 1.0) ** 2 - m * m) / (2.0 * l - 3.0)) * plm2))
                P[m, l] = pl_
                plm2, plm1 = plm1, pl_
    return P


# --------------------------------------------------------------------------------------
# Fused Pallas kernel factory
# --------------------------------------------------------------------------------------
def make_fused_fre_loss(*, bs_pad, npoint, k, neg_inv_2s2, B_blk, chunk, lane_sub,
                        nc, nlm, lm_tile, lmp, ngrid_pad, compute_dtype):
    use_exp = neg_inv_2s2 is not None
    n_sub = chunk // lane_sub
    nb = bs_pad // B_blk

    def kernel(pts_ref, th_ref, ph_ref, a_ref, tgt_ref, rw_ref,
               out_ref, field_ref, acc_ref):
        c = pl.program_id(2)

        # --- init coeff accumulator for this (batch block, lm tile) ---
        @pl.when(c == 0)
        def _():
            acc_ref[...] = jnp.zeros_like(acc_ref)

        # --- kNN + distance-weighted interpolation over this chunk of grid nodes.
        #     Processed in (B_blk, lane_sub) sub-tiles so live state is O(k) vregs;
        #     results land in the field VMEM scratch that feeds the matmul. ---
        @pl.loop(0, n_sub)
        def _knn(s):
            off = pl.multiple_of(s * lane_sub, lane_sub)
            th = jnp.broadcast_to(th_ref[0, :, pl.ds(off, lane_sub)], (B_blk, lane_sub))
            ph = jnp.broadcast_to(ph_ref[0, :, pl.ds(off, lane_sub)], (B_blk, lane_sub))

            best_d = [jnp.full((B_blk, lane_sub), 1e30, jnp.float32) for _ in range(k)]
            best_r = [jnp.zeros((B_blk, lane_sub), jnp.float32) for _ in range(k)]

            # single pass over points, k-deep insertion ladder (no idx, no invalidation)
            for p in range(npoint):
                tp = pts_ref[:, p:p + 1]                            # (B_blk, 1)
                pp = pts_ref[:, npoint + p:npoint + p + 1]
                rp = pts_ref[:, 2 * npoint + p:2 * npoint + p + 1]
                dt = th - tp
                dp = ph - pp
                d = dt * dt + dp * dp
                r = jnp.broadcast_to(rp, (B_blk, lane_sub))
                for j in range(k):
                    closer = d < best_d[j]
                    nd = jnp.where(closer, d, best_d[j])
                    nr = jnp.where(closer, r, best_r[j])
                    d = jnp.where(closer, best_d[j], d)             # carry displaced value down
                    r = jnp.where(closer, best_r[j], r)
                    best_d[j] = nd
                    best_r[j] = nr

            acc_w = jnp.zeros((B_blk, lane_sub), jnp.float32)
            wsum = jnp.zeros((B_blk, lane_sub), jnp.float32)
            for j in range(k):
                if use_exp:
                    w = jnp.exp(best_d[j] * neg_inv_2s2)            # EUP
                else:
                    w = best_d[j]                                   # matches reference (w = d^2)
                acc_w = acc_w + w * best_r[j]
                wsum = wsum + w
            # NOTE: no epsilon on wsum, matching the original module.
            field_ref[:, pl.ds(off, lane_sub)] = acc_w * pl.reciprocal(wsum, approx=True)

        # --- folded real-SHT: one long-K MXU matmul per chunk, f32 accumulation ---
        acc_ref[...] += jnp.dot(field_ref[...].astype(compute_dtype), a_ref[...],
                                preferred_element_type=jnp.float32)

        # --- finalize: rect-weighted squared error (lane-dense output block) ---
        @pl.when(c == pl.num_programs(2) - 1)
        def _():
            dlt = acc_ref[...] - tgt_ref[...]
            out_ref[...] = dlt * dlt * rw_ref[...]

    return pl.pallas_call(
        kernel,
        out_shape=jax.ShapeDtypeStruct((bs_pad, lmp), jnp.float32),
        grid_spec=pltpu.PrefetchScalarGridSpec(
            num_scalar_prefetch=0,
            grid=(nb, nlm, nc),
            in_specs=[
                pl.BlockSpec((B_blk, 3 * npoint), lambda b, l, c: (b, 0)),   # point table
                pl.BlockSpec((1, 1, chunk), lambda b, l, c: (c, 0, 0)),      # theta grid chunk
                pl.BlockSpec((1, 1, chunk), lambda b, l, c: (c, 0, 0)),      # phi grid chunk
                pl.BlockSpec((chunk, lm_tile), lambda b, l, c: (c, l)),      # streamed A tile
                pl.BlockSpec((B_blk, lm_tile), lambda b, l, c: (b, l)),      # target coeffs
                pl.BlockSpec((1, lm_tile), lambda b, l, c: (0, l)),          # rect weights
            ],
            out_specs=pl.BlockSpec((B_blk, lm_tile), lambda b, l, c: (b, l)),
            scratch_shapes=[
                pltpu.VMEM((B_blk, chunk), jnp.float32),     # interpolated field
                pltpu.VMEM((B_blk, lm_tile), jnp.float32),   # coeff accumulator
            ],
        ),
        compiler_params=pltpu.CompilerParams(
            dimension_semantics=("parallel", "parallel", "arbitrary"),
            vmem_limit_bytes=64 * 1024 * 1024,
        ),
    )


# --------------------------------------------------------------------------------------
# Module wrapper
# --------------------------------------------------------------------------------------
class FreLossPrecomputedPallas:
    B_BLK = 8          # batch block (MXU M dim / sublane fill)
    LANE_SUB = 256     # lane sub-tile width for the kNN ladder

    def __init__(self, nlat=16, nlon=32, lmax=8, mmax=8, k=5, s_knn=None,
                 distance="euclidean", compute_dtype=jnp.bfloat16):
        assert distance == "euclidean"
        assert nlon == 2 * nlat, "grid construction in the reference implies nlon == 2*nlat"
        self.nlat, self.nlon, self.lmax, self.mmax, self.k = nlat, nlon, lmax, mmax, k
        self.s2_knn = (s_knn ** 2) if s_knn is not None else None
        self.inv_2s2 = (1.0 / (2.0 * self.s2_knn)) if self.s2_knn is not None else None
        self.neg_inv_2s2 = (-self.inv_2s2) if self.inv_2s2 is not None else None
        self.s2_fre = lmax ** 2
        self.compute_dtype = compute_dtype

        ngrid = nlat * nlon
        self.chunk = min(4096, _round_up(ngrid, 1024))       # grid nodes per reduction step
        self.ngrid_pad = _round_up(ngrid, self.chunk)
        self.nc = self.ngrid_pad // self.chunk

        # flattened equiangular grid coordinates (lat-major, matching the reference ravel)
        lat_idx = np.repeat(np.arange(nlat), nlon).astype(np.float64)
        lon_idx = np.tile(np.arange(nlon), nlat).astype(np.float64)
        theta_flat = lat_idx / nlat * np.pi
        phi_flat = (lon_idx - nlat) / nlat * np.pi
        pad = self.ngrid_pad - ngrid
        theta_pad = np.concatenate([theta_flat, np.full(pad, theta_flat[0])]) if pad else theta_flat
        phi_pad = np.concatenate([phi_flat, np.full(pad, phi_flat[0])]) if pad else phi_flat
        self.theta_grid = jnp.asarray(theta_pad.reshape(self.nc, 1, self.chunk), jnp.float32)
        self.phi_grid = jnp.asarray(phi_pad.reshape(self.nc, 1, self.chunk), jnp.float32)
        self.theta_ref = jnp.asarray(theta_flat, jnp.float32)
        self.phi_ref = jnp.asarray(phi_flat, jnp.float32)

        # SHT precompute: quadrature x orthonormal Legendre folded with the cos-DFT into
        # one matrix A[(lat*nlon+lon), (l*mmax+m)]  (torch_harmonics flips the lat axis).
        cost, wq = clenshaw_curtis(nlat)
        P = legendre_normalized(mmax, lmax, cost)                            # (mmax, lmax, nlat)
        W = (P * wq[None, None, :])[:, :, ::-1]
        j = np.arange(nlon)[:, None]
        m = np.arange(mmax)[None, :]
        C = (2.0 * np.pi / nlon) * np.cos(2.0 * np.pi * j * m / nlon)        # real(2*pi*rfft)
        A = np.einsum('mlk,jm->kjlm', W, C).reshape(ngrid, lmax * mmax)

        self.LM = lmax * mmax
        self.LMp = _round_up(self.LM, 128)
        for t in (512, 256, 128):
            if self.LMp % t == 0:
                self.LM_TILE = t
                break
        self.nlm = self.LMp // self.LM_TILE

        A_pad = np.zeros((self.ngrid_pad, self.LMp), np.float32)
        A_pad[:ngrid, :self.LM] = A
        self.A = jnp.asarray(A_pad).astype(compute_dtype)                    # streamed bf16 tiles
        self.A_ref = jnp.asarray(A.astype(np.float32))                       # f32, reference only

        rwl = np.exp(-(lmax - np.arange(1, lmax + 1)) ** 2 / (2.0 * self.s2_fre))
        rw_flat = np.zeros((1, self.LMp), np.float32)
        rw_flat[0, :self.LM] = np.repeat(rwl, mmax)                          # pre-broadcast over m
        self.rw = jnp.asarray(rw_flat)
        self.rw_ref = jnp.asarray(np.repeat(rwl, mmax).astype(np.float32))

    def __call__(self, pred, target_coeffs):
        bs, npoint, _ = pred.shape
        assert npoint >= self.k
        r, sph = to_spherical(pred.astype(jnp.float32))                      # r:(bs,1,np) sph:(bs,np,2)
        theta_p = sph[:, :, 0]
        phi_p = sph[:, :, 1] - math.pi
        # per-batch point table [theta | phi | r]
        pts = jnp.concatenate([theta_p, phi_p, r[:, 0, :]], axis=-1).astype(jnp.float32)

        tgt = target_coeffs.astype(jnp.float32).reshape(bs, self.LM)
        if self.LMp > self.LM:
            tgt = jnp.pad(tgt, ((0, 0), (0, self.LMp - self.LM)))

        bs_pad = _round_up(bs, self.B_BLK)
        if bs_pad > bs:
            pad = bs_pad - bs
            pts = jnp.concatenate([pts, jnp.broadcast_to(pts[:1], (pad, pts.shape[1]))], axis=0)
            tgt = jnp.concatenate([tgt, jnp.zeros((pad, self.LMp), jnp.float32)], axis=0)

        fused = make_fused_fre_loss(
            bs_pad=bs_pad, npoint=npoint, k=self.k, neg_inv_2s2=self.neg_inv_2s2,
            B_blk=self.B_BLK, chunk=self.chunk, lane_sub=self.LANE_SUB,
            nc=self.nc, nlm=self.nlm, lm_tile=self.LM_TILE, lmp=self.LMp,
            ngrid_pad=self.ngrid_pad, compute_dtype=self.compute_dtype)

        wse = fused(pts, self.theta_grid, self.phi_grid, self.A, tgt, self.rw)  # (bs_pad, LMp)
        return jnp.sum(wse[:bs]) / bs          # padded LM lanes carry rw = 0 -> contribute 0

    # Pure-JAX reference (same math, f32 end-to-end, no Pallas) — self-check only.
    def reference(self, pred, target_coeffs):
        bs, npoint, _ = pred.shape
        r, sph = to_spherical(pred.astype(jnp.float32))
        theta_p = sph[:, :, 0]
        phi_p = sph[:, :, 1] - math.pi
        rvals = r[:, 0, :]
        tg, pg = self.theta_ref, self.phi_ref
        d2 = ((tg[None, :, None] - theta_p[:, None, :]) ** 2 +
              (pg[None, :, None] - phi_p[:, None, :]) ** 2)                  # (bs, ngrid, npoint)
        neg_top, idx = jax.lax.top_k(-d2, self.k)
        dsel = -neg_top
        w = jnp.exp(-dsel * self.inv_2s2) if self.inv_2s2 is not None else dsel
        wn = w / jnp.sum(w, axis=-1, keepdims=True)
        rsel = jnp.take_along_axis(jnp.broadcast_to(rvals[:, None, :], d2.shape), idx, axis=-1)
        field = jnp.sum(rsel * wn, axis=-1)                                  # (bs, ngrid)
        coeffs = field @ self.A_ref                                          # (bs, lmax*mmax)
        diff = coeffs - target_coeffs.astype(jnp.float32).reshape(bs, self.LM)
        return jnp.mean(jnp.sum(diff * diff * self.rw_ref[None, :], axis=-1))


if __name__ == "__main__":
    key = jax.random.PRNGKey(0)
    k1, k2 = jax.random.split(key)

    bs, npoint = 2, 8
    nlat, nlon, lmax, mmax, kk = 16, 32, 8, 8, 5

    pred = jax.random.normal(k1, (bs, npoint, 3), dtype=jnp.float32)
    target_coeffs = 0.1 * jax.random.normal(k2, (bs, lmax, mmax), dtype=jnp.float32)

    # s_knn=1.0 exercises the gaussian-weight path without exp() underflowing to zero
    # (the reference normalizes by sum(w) with no epsilon, same as the PyTorch module).
    mod = FreLossPrecomputedPallas(nlat=nlat, nlon=nlon, lmax=lmax, mmax=mmax, k=kk, s_knn=1.0)

    out = jax.jit(mod.__call__)(pred, target_coeffs)
    jax.block_until_ready(out)
    assert out.shape == () and bool(jnp.isfinite(out)), out

    # Tolerance accounts for bf16 A/field on the MXU and the approx reciprocal (EUP).
    ref = mod.reference(pred, target_coeffs)
    assert bool(jnp.allclose(out, ref, rtol=2e-2, atol=1e-4)), (out, ref)

    print("KERNEL_OK")
</pallas_src>

<mosaic_0001>
module attributes {stable_mosaic.version = 11 : i64} {
  func.func @kernel(%arg0: i32, %arg1: i32, %arg2: i32, %arg3: memref<8x24xf32, #tpu.memory_space<vmem>>, %arg4: memref<1x1x1024xf32, #tpu.memory_space<vmem>>, %arg5: memref<1x1x1024xf32, #tpu.memory_space<vmem>>, %arg6: memref<1024x128xbf16, #tpu.memory_space<vmem>>, %arg7: memref<8x128xf32, #tpu.memory_space<vmem>>, %arg8: memref<1x128xf32, #tpu.memory_space<vmem>>, %arg9: memref<8x128xf32, #tpu.memory_space<vmem>>, %arg10: memref<8x1024xf32, #tpu.memory_space<vmem>>, %arg11: memref<8x128xf32, #tpu.memory_space<vmem>>) attributes {dimension_semantics = [#tpu.dimension_semantics<parallel>, #tpu.dimension_semantics<parallel>, #tpu.dimension_semantics<arbitrary>], iteration_bounds = array<i64: 1, 1, 1>, scalar_prefetch = 0 : i64, scratch_operands = 2 : i64, tpu.core_type = #tpu.core_type<tc>, window_params = [{transform_indices = @transform_0, window_bounds = array<i64: 8, 24>}, {transform_indices = @transform_1, window_bounds = array<i64: 1, 1, 1024>}, {transform_indices = @transform_2, window_bounds = array<i64: 1, 1, 1024>}, {transform_indices = @transform_3, window_bounds = array<i64: 1024, 128>}, {transform_indices = @transform_4, window_bounds = array<i64: 8, 128>}, {transform_indices = @transform_5, window_bounds = array<i64: 1, 128>}, {transform_indices = @transform_6, window_bounds = array<i64: 8, 128>}]} {
    %c0_i32 = arith.constant 0 : i32
    %0 = arith.cmpi eq, %arg2, %c0_i32 : i32
    %1 = arith.extui %0 : i1 to i32
    %c0_i32_0 = arith.constant 0 : i32
    %2 = arith.cmpi ne, %1, %c0_i32_0 : i32
    scf.if %2 {
      %cst_12 = arith.constant 0.000000e+00 : f32
      %14 = vector.broadcast %cst_12 : f32 to vector<8x128xf32>
      %c0_13 = arith.constant 0 : index
      %c0_14 = arith.constant 0 : index
      %15 = vector.load %arg11[%c0_13, %c0_14] : memref<8x128xf32, #tpu.memory_space<vmem>>, vector<8x128xf32>
      tpu.vector_store %arg11[%c0_13, %c0_14], %14 {strides = array<i32>} : memref<8x128xf32, #tpu.memory_space<vmem>>, vector<8x128xf32>,
    } else {
    }
    %c0_i32_1 = arith.constant 0 : i32
    %c4_i32 = arith.constant 4 : i32
    %3 = arith.addi %c0_i32_1, %c4_i32 : i32
    %c1_i32 = arith.constant 1 : i32
    scf.for %arg12 = %c0_i32_1 to %3 step %c1_i32  : i32 {
      %c1_i32_12 = arith.constant 1 : i32
      %14 = arith.muli %arg12, %c1_i32_12 : i32
      %c0_i32_13 = arith.constant 0 : i32
      %15 = arith.addi %c0_i32_13, %14 : i32
      %c256_i32 = arith.constant 256 : i32
      %16 = arith.muli %15, %c256_i32 : i32
      %17 = tpu.assume_multiple %16, 256 : i32
      %c0_14 = arith.constant 0 : index
      %c0_15 = arith.constant 0 : index
      %18 = arith.index_cast %17 : i32 to index
      %19 = vector.load %arg4[%c0_14, %c0_15, %18] : memref<1x1x1024xf32, #tpu.memory_space<vmem>>, vector<1x1x256xf32>
      %20 = vector.shape_cast %19 : vector<1x1x256xf32> to vector<1x256xf32>
      %21 = vector.shape_cast %20 : vector<1x256xf32> to vector<1x256xf32>
      %22 = vector.broadcast %21 : vector<1x256xf32> to vector<8x256xf32>
      %c0_16 = arith.constant 0 : index
      %c0_17 = arith.constant 0 : index
      %23 = arith.index_cast %17 : i32 to index
      %24 = vector.load %arg5[%c0_16, %c0_17, %23] : memref<1x1x1024xf32, #tpu.memory_space<vmem>>, vector<1x1x256xf32>
      %25 = vector.shape_cast %24 : vector<1x1x256xf32> to vector<1x256xf32>
      %26 = vector.shape_cast %25 : vector<1x256xf32> to vector<1x256xf32>
      %27 = vector.broadcast %26 : vector<1x256xf32> to vector<8x256xf32>
      %cst_18 = arith.constant 1.000000e+30 : f32
      %28 = vector.broadcast %cst_18 : f32 to vector<8x256xf32>
      %cst_19 = arith.constant 1.000000e+30 : f32
      %29 = vector.broadcast %cst_19 : f32 to vector<8x256xf32>
      %cst_20 = arith.constant 1.000000e+30 : f32
      %30 = vector.broadcast %cst_20 : f32 to vector<8x256xf32>
      %cst_21 = arith.constant 1.000000e+30 : f32
      %31 = vector.broadcast %cst_21 : f32 to vector<8x256xf32>
      %cst_22 = arith.constant 1.000000e+30 : f32
      %32 = vector.broadcast %cst_22 : f32 to vector<8x256xf32>
      %cst_23 = arith.constant 0.000000e+00 : f32
      %33 = vector.broadcast %cst_23 : f32 to vector<8x256xf32>
      %cst_24 = arith.constant 0.000000e+00 : f32
      %34 = vector.broadcast %cst_24 : f32 to vector<8x256xf32>
      %cst_25 = arith.constant 0.000000e+00 : f32
      %35 = vector.broadcast %cst_25 : f32 to vector<8x256xf32>
      %cst_26 = arith.constant 0.000000e+00 : f32
      %36 = vector.broadcast %cst_26 : f32 to vector<8x256xf32>
      %cst_27 = arith.constant 0.000000e+00 : f32
      %37 = vector.broadcast %cst_27 : f32 to vector<8x256xf32>
      %c0_28 = arith.constant 0 : index
      %c0_29 = arith.constant 0 : index
      %38 = vector.load %arg3[%c0_28, %c0_29] : memref<8x24xf32, #tpu.memory_space<vmem>>, vector<8x1xf32>
      %c0_30 = arith.constant 0 : index
      %c8 = arith.constant 8 : index
      %39 = vector.load %arg3[%c0_30, %c8] : memref<8x24xf32, #tpu.memory_space<vmem>>, vector<8x1xf32>
      %c0_31 = arith.constant 0 : index
      %c16 = arith.constant 16 : index
      %40 = vector.load %arg3[%c0_31, %c16] : memref<8x24xf32, #tpu.memory_space<vmem>>, vector<8x1xf32>
      %41 = vector.broadcast %38 : vector<8x1xf32> to vector<8x256xf32>
      %42 = arith.subf %22, %41 : vector<8x256xf32>
      %43 = vector.broadcast %39 : vector<8x1xf32> to vector<8x256xf32>
      %44 = arith.subf %27, %43 : vector<8x256xf32>
      %45 = arith.mulf %42, %42 : vector<8x256xf32>
      %46 = arith.mulf %44, %44 : vector<8x256xf32>
      %47 = arith.addf %45, %46 : vector<8x256xf32>
      %48 = vector.shape_cast %40 : vector<8x1xf32> to vector<8x1xf32>
      %49 = vector.broadcast %48 : vector<8x1xf32> to vector<8x256xf32>
      %50 = arith.cmpf olt, %47, %28 : vector<8x256xf32>
      %51 = arith.select %50, %47, %28 : vector<8x256xi1>, vector<8x256xf32>
      %52 = arith.select %50, %49, %33 : vector<8x256xi1>, vector<8x256xf32>
      %53 = arith.select %50, %28, %47 : vector<8x256xi1>, vector<8x256xf32>
      %54 = arith.select %50, %33, %49 : vector<8x256xi1>, vector<8x256xf32>
      %55 = arith.cmpf olt, %53, %29 : vector<8x256xf32>
      %56 = arith.select %55, %53, %29 : vector<8x256xi1>, vector<8x256xf32>
      %57 = arith.select %55, %54, %34 : vector<8x256xi1>, vector<8x256xf32>
      %58 = arith.select %55, %29, %53 : vector<8x256xi1>, vector<8x256xf32>
      %59 = arith.select %55, %34, %54 : vector<8x256xi1>, vector<8x256xf32>
      %60 = arith.cmpf olt, %58, %30 : vector<8x256xf32>
      %61 = arith.select %60, %58, %30 : vector<8x256xi1>, vector<8x256xf32>
      %62 = arith.select %60, %59, %35 : vector<8x256xi1>, vector<8x256xf32>
      %63 = arith.select %60, %30, %58 : vector<8x256xi1>, vector<8x256xf32>
      %64 = arith.select %60, %35, %59 : vector<8x256xi1>, vector<8x256xf32>
      %65 = arith.cmpf olt, %63, %31 : vector<8x256xf32>
      %66 = arith.select %65, %63, %31 : vector<8x256xi1>, vector<8x256xf32>
      %67 = arith.select %65, %64, %36 : vector<8x256xi1>, vector<8x256xf32>
      %68 = arith.select %65, %31, %63 : vector<8x256xi1>, vector<8x256xf32>
      %69 = arith.select %65, %36, %64 : vector<8x256xi1>, vector<8x256xf32>
      %70 = arith.cmpf olt, %68, %32 : vector<8x256xf32>
      %71 = arith.select %70, %68, %32 : vector<8x256xi1>, vector<8x256xf32>
      %72 = arith.select %70, %69, %37 : vector<8x256xi1>, vector<8x256xf32>
      %c0_32 = arith.constant 0 : index
      %c1 = arith.constant 1 : index
      %73 = vector.load %arg3[%c0_32, %c1] : memref<8x24xf32, #tpu.memory_space<vmem>>, vector<8x1xf32>
      %c0_33 = arith.constant 0 : index
      %c9 = arith.constant 9 : index
      %74 = vector.load %arg3[%c0_33, %c9] : memref<8x24xf32, #tpu.memory_space<vmem>>, vector<8x1xf32>
      %c0_34 = arith.constant 0 : index
      %c17 = arith.constant 17 : index
      %75 = vector.load %arg3[%c0_34, %c17] : memref<8x24xf32, #tpu.memory_space<vmem>>, vector<8x1xf32>
      %76 = vector.broadcast %73 : vector<8x1xf32> to vector<8x256xf32>
      %77 = arith.subf %22, %76 : vector<8x256xf32>
      %78 = vector.broadcast %74 : vector<8x1xf32> to vector<8x256xf32>
      %79 = arith.subf %27, %78 : vector<8x256xf32>
      %80 = arith.mulf %77, %77 : vector<8x256xf32>
      %81 = arith.mulf %79, %79 : vector<8x256xf32>
      %82 = arith.addf %80, %81 : vector<8x256xf32>
      %83 = vector.shape_cast %75 : vector<8x1xf32> to vector<8x1xf32>
      %84 = vector.broadcast %83 : vector<8x1xf32> to vector<8x256xf32>
      %85 = arith.cmpf olt, %82, %51 : vector<8x256xf32>
      %86 = arith.select %85, %82, %51 : vector<8x256xi1>, vector<8x256xf32>
      %87 = arith.select %85, %84, %52 : vector<8x256xi1>, vector<8x256xf32>
      %88 = arith.select %85, %51, %82 : vector<8x256xi1>, vector<8x256xf32>
      %89 = arith.select %85, %52, %84 : vector<8x256xi1>, vector<8x256xf32>
      %90 = arith.cmpf olt, %88, %56 : vector<8x256xf32>
      %91 = arith.select %90, %88, %56 : vector<8x256xi1>, vector<8x256xf32>
      %92 = arith.select %90, %89, %57 : vector<8x256xi1>, vector<8x256xf32>
      %93 = arith.select %90, %56, %88 : vector<8x256xi1>, vector<8x256xf32>
      %94 = arith.select %90, %57, %89 : vector<8x256xi1>, vector<8x256xf32>
      %95 = arith.cmpf olt, %93, %61 : vector<8x256xf32>
      %96 = arith.select %95, %93, %61 : vector<8x256xi1>, vector<8x256xf32>
      %97 = arith.select %95, %94, %62 : vector<8x256xi1>, vector<8x256xf32>
      %98 = arith.select %95, %61, %93 : vector<8x256xi1>, vector<8x256xf32>
      %99 = arith.select %95, %62, %94 : vector<8x256xi1>, vector<8x256xf32>
      %100 = arith.cmpf olt, %98, %66 : vector<8x256xf32>
      %101 = arith.select %100, %98, %66 : vector<8x256xi1>, vector<8x256xf32>
      %102 = arith.select %100, %99, %67 : vector<8x256xi1>, vector<8x256xf32>
      %103 = arith.select %100, %66, %98 : vector<8x256xi1>, vector<8x256xf32>
      %104 = arith.select %100, %67, %99 : vector<8x256xi1>, vector<8x256xf32>
      %105 = arith.cmpf olt, %103, %71 : vector<8x256xf32>
      %106 = arith.select %105, %103, %71 : vector<8x256xi1>, vector<8x256xf32>
      %107 = arith.select %105, %104, %72 : vector<8x256xi1>, vector<8x256xf32>
      %c0_35 = arith.constant 0 : index
      %c2 = arith.constant 2 : index
      %108 = vector.load %arg3[%c0_35, %c2] : memref<8x24xf32, #tpu.memory_space<vmem>>, vector<8x1xf32>
      %c0_36 = arith.constant 0 : index
      %c10 = arith.constant 10 : index
      %109 = vector.load %arg3[%c0_36, %c10] : memref<8x24xf32, #tpu.memory_space<vmem>>, vector<8x1xf32>
      %c0_37 = arith.constant 0 : index
      %c18 = arith.constant 18 : index
      %110 = vector.load %arg3[%c0_37, %c18] : memref<8x24xf32, #tpu.memory_space<vmem>>, vector<8x1xf32>
      %111 = vector.broadcast %108 : vector<8x1xf32> to vector<8x256xf32>
      %112 = arith.subf %22, %111 : vector<8x256xf32>
      %113 = vector.broadcast %109 : vector<8x1xf32> to vector<8x256xf32>
      %114 = arith.subf %27, %113 : vector<8x256xf32>
      %115 = arith.mulf %112, %112 : vector<8x256xf32>
      %116 = arith.mulf %114, %114 : vector<8x256xf32>
      %117 = arith.addf %115, %116 : vector<8x256xf32>
      %118 = vector.shape_cast %110 : vector<8x1xf32> to vector<8x1xf32>
      %119 = vector.broadcast %118 : vector<8x1xf32> to vector<8x256xf32>
      %120 = arith.cmpf olt, %117, %86 : vector<8x256xf32>
      %121 = arith.select %120, %117, %86 : vector<8x256xi1>, vector<8x256xf32>
      %122 = arith.select %120, %119, %87 : vector<8x256xi1>, vector<8x256xf32>
      %123 = arith.select %120, %86, %117 : vector<8x256xi1>, vector<8x256xf32>
      %124 = arith.select %120, %87, %119 : vector<8x256xi1>, vector<8x256xf32>
      %125 = arith.cmpf olt, %123, %91 : vector<8x256xf32>
      %126 = arith.select %125, %123, %91 : vector<8x256xi1>, vector<8x256xf32>
      %127 = arith.select %125, %124, %92 : vector<8x256xi1>, vector<8x256xf32>
      %128 = arith.select %125, %91, %123 : vector<8x256xi1>, vector<8x256xf32>
      %129 = arith.select %125, %92, %124 : vector<8x256xi1>, vector<8x256xf32>
      %130 = arith.cmpf olt, %128, %96 : vector<8x256xf32>
      %131 = arith.select %130, %128, %96 : vector<8x256xi1>, vector<8x256xf32>
      %132 = arith.select %130, %129, %97 : vector<8x256xi1>, vector<8x256xf32>
      %133 = arith.select %130, %96, %128 : vector<8x256xi1>, vector<8x256xf32>
      %134 = arith.select %130, %97, %129 : vector<8x256xi1>, vector<8x256xf32>
      %135 = arith.cmpf olt, %133, %101 : vector<8x256xf32>
      %136 = arith.select %135, %133, %101 : vector<8x256xi1>, vector<8x256xf32>
      %137 = arith.select %135, %134, %102 : vector<8x256xi1>, vector<8x256xf32>
      %138 = arith.select %135, %101, %133 : vector<8x256xi1>, vector<8x256xf32>
      %139 = arith.select %135, %102, %134 : vector<8x256xi1>, vector<8x256xf32>
      %140 = arith.cmpf olt, %138, %106 : vector<8x256xf32>
      %141 = arith.select %140, %138, %106 : vector<8x256xi1>, vector<8x256xf32>
      %142 = arith.select %140, %139, %107 : vector<8x256xi1>, vector<8x256xf32>
      %c0_38 = arith.constant 0 : index
      %c3 = arith.constant 3 : index
      %143 = vector.load %arg3[%c0_38, %c3] : memref<8x24xf32, #tpu.memory_space<vmem>>, vector<8x1xf32>
      %c0_39 = arith.constant 0 : index
      %c11 = arith.constant 11 : index
      %144 = vector.load %arg3[%c0_39, %c11] : memref<8x24xf32, #tpu.memory_space<vmem>>, vector<8x1xf32>
      %c0_40 = arith.constant 0 : index
      %c19 = arith.constant 19 : index
      %145 = vector.load %arg3[%c0_40, %c19] : memref<8x24xf32, #tpu.memory_space<vmem>>, vector<8x1xf32>
      %146 = vector.broadcast %143 : vector<8x1xf32> to vector<8x256xf32>
      %147 = arith.subf %22, %146 : vector<8x256xf32>
      %148 = vector.broadcast %144 : vector<8x1xf32> to vector<8x256xf32>
      %149 = arith.subf %27, %148 : vector<8x256xf32>
      %150 = arith.mulf %147, %147 : vector<8x256xf32>
      %151 = arith.mulf %149, %149 : vector<8x256xf32>
      %152 = arith.addf %150, %151 : vector<8x256xf32>
      %153 = vector.shape_cast %145 : vector<8x1xf32> to vector<8x1xf32>
      %154 = vector.broadcast %153 : vector<8x1xf32> to vector<8x256xf32>
      %155 = arith.cmpf olt, %152, %121 : vector<8x256xf32>
      %156 = arith.select %155, %152, %121 : vector<8x256xi1>, vector<8x256xf32>
      %157 = arith.select %155, %154, %122 : vector<8x256xi1>, vector<8x256xf32>
      %158 = arith.select %155, %121, %152 : vector<8x256xi1>, vector<8x256xf32>
      %159 = arith.select %155, %122, %154 : vector<8x256xi1>, vector<8x256xf32>
      %160 = arith.cmpf olt, %158, %126 : vector<8x256xf32>
      %161 = arith.select %160, %158, %126 : vector<8x256xi1>, vector<8x256xf32>
      %162 = arith.select %160, %159, %127 : vector<8x256xi1>, vector<8x256xf32>
      %163 = arith.select %160, %126, %158 : vector<8x256xi1>, vector<8x256xf32>
      %164 = arith.select %160, %127, %159 : vector<8x256xi1>, vector<8x256xf32>
      %165 = arith.cmpf olt, %163, %131 : vector<8x256xf32>
      %166 = arith.select %165, %163, %131 : vector<8x256xi1>, vector<8x256xf32>
      %167 = arith.select %165, %164, %132 : vector<8x256xi1>, vector<8x256xf32>
      %168 = arith.select %165, %131, %163 : vector<8x256xi1>, vector<8x256xf32>
      %169 = arith.select %165, %132, %164 : vector<8x256xi1>, vector<8x256xf32>
      %170 = arith.cmpf olt, %168, %136 : vector<8x256xf32>
      %171 = arith.select %170, %168, %136 : vector<8x256xi1>, vector<8x256xf32>
      %172 = arith.select %170, %169, %137 : vector<8x256xi1>, vector<8x256xf32>
      %173 = arith.select %170, %136, %168 : vector<8x256xi1>, vector<8x256xf32>
      %174 = arith.select %170, %137, %169 : vector<8x256xi1>, vector<8x256xf32>
      %175 = arith.cmpf olt, %173, %141 : vector<8x256xf32>
      %176 = arith.select %175, %173, %141 : vector<8x256xi1>, vector<8x256xf32>
      %177 = arith.select %175, %174, %142 : vector<8x256xi1>, vector<8x256xf32>
      %c0_41 = arith.constant 0 : index
      %c4 = arith.constant 4 : index
      %178 = vector.load %arg3[%c0_41, %c4] : memref<8x24xf32, #tpu.memory_space<vmem>>, vector<8x1xf32>
      %c0_42 = arith.constant 0 : index
      %c12 = arith.constant 12 : index
      %179 = vector.load %arg3[%c0_42, %c12] : memref<8x24xf32, #tpu.memory_space<vmem>>, vector<8x1xf32>
      %c0_43 = arith.constant 0 : index
      %c20 = arith.constant 20 : index
      %180 = vector.load %arg3[%c0_43, %c20] : memref<8x24xf32, #tpu.memory_space<vmem>>, vector<8x1xf32>
      %181 = vector.broadcast %178 : vector<8x1xf32> to vector<8x256xf32>
      %182 = arith.subf %22, %181 : vector<8x256xf32>
      %183 = vector.broadcast %179 : vector<8x1xf32> to vector<8x256xf32>
      %184 = arith.subf %27, %183 : vector<8x256xf32>
      %185 = arith.mulf %182, %182 : vector<8x256xf32>
      %186 = arith.mulf %184, %184 : vector<8x256xf32>
      %187 = arith.addf %185, %186 : vector<8x256xf32>
      %188 = vector.shape_cast %180 : vector<8x1xf32> to vector<8x1xf32>
      %189 = vector.broadcast %188 : vector<8x1xf32> to vector<8x256xf32>
      %190 = arith.cmpf olt, %187, %156 : vector<8x256xf32>
      %191 = arith.select %190, %187, %156 : vector<8x256xi1>, vector<8x256xf32>
      %192 = arith.select %190, %189, %157 : vector<8x256xi1>, vector<8x256xf32>
      %193 = arith.select %190, %156, %187 : vector<8x256xi1>, vector<8x256xf32>
      %194 = arith.select %190, %157, %189 : vector<8x256xi1>, vector<8x256xf32>
      %195 = arith.cmpf olt, %193, %161 : vector<8x256xf32>
      %196 = arith.select %195, %193, %161 : vector<8x256xi1>, vector<8x256xf32>
      %197 = arith.select %195, %194, %162 : vector<8x256xi1>, vector<8x256xf32>
      %198 = arith.select %195, %161, %193 : vector<8x256xi1>, vector<8x256xf32>
      %199 = arith.select %195, %162, %194 : vector<8x256xi1>, vector<8x256xf32>
      %200 = arith.cmpf olt, %198, %166 : vector<8x256xf32>
      %201 = arith.select %200, %198, %166 : vector<8x256xi1>, vector<8x256xf32>
      %202 = arith.select %200, %199, %167 : vector<8x256xi1>, vector<8x256xf32>
      %203 = arith.select %200, %166, %198 : vector<8x256xi1>, vector<8x256xf32>
      %204 = arith.select %200, %167, %199 : vector<8x256xi1>, vector<8x256xf32>
      %205 = arith.cmpf olt, %203, %171 : vector<8x256xf32>
      %206 = arith.select %205, %203, %171 : vector<8x256xi1>, vector<8x256xf32>
      %207 = arith.select %205, %204, %172 : vector<8x256xi1>, vector<8x256xf32>
      %208 = arith.select %205, %171, %203 : vector<8x256xi1>, vector<8x256xf32>
      %209 = arith.select %205, %172, %204 : vector<8x256xi1>, vector<8x256xf32>
      %210 = arith.cmpf olt, %208, %176 : vector<8x256xf32>
      %211 = arith.select %210, %208, %176 : vector<8x256xi1>, vector<8x256xf32>
      %212 = arith.select %210, %209, %177 : vector<8x256xi1>, vector<8x256xf32>
      %c0_44 = arith.constant 0 : index
      %c5 = arith.constant 5 : index
      %213 = vector.load %arg3[%c0_44, %c5] : memref<8x24xf32, #tpu.memory_space<vmem>>, vector<8x1xf32>
      %c0_45 = arith.constant 0 : index
      %c13 = arith.constant 13 : index
      %214 = vector.load %arg3[%c0_45, %c13] : memref<8x24xf32, #tpu.memory_space<vmem>>, vector<8x1xf32>
      %c0_46 = arith.constant 0 : index
      %c21 = arith.constant 21 : index
      %215 = vector.load %arg3[%c0_46, %c21] : memref<8x24xf32, #tpu.memory_space<vmem>>, vector<8x1xf32>
      %216 = vector.broadcast %213 : vector<8x1xf32> to vector<8x256xf32>
      %217 = arith.subf %22, %216 : vector<8x256xf32>
      %218 = vector.broadcast %214 : vector<8x1xf32> to vector<8x256xf32>
      %219 = arith.subf %27, %218 : vector<8x256xf32>
      %220 = arith.mulf %217, %217 : vector<8x256xf32>
      %221 = arith.mulf %219, %219 : vector<8x256xf32>
      %222 = arith.addf %220, %221 : vector<8x256xf32>
      %223 = vector.shape_cast %215 : vector<8x1xf32> to vector<8x1xf32>
      %224 = vector.broadcast %223 : vector<8x1xf32> to vector<8x256xf32>
      %225 = arith.cmpf olt, %222, %191 : vector<8x256xf32>
      %226 = arith.select %225, %222, %191 : vector<8x256xi1>, vector<8x256xf32>
      %227 = arith.select %225, %224, %192 : vector<8x256xi1>, vector<8x256xf32>
      %228 = arith.select %225, %191, %222 : vector<8x256xi1>, vector<8x256xf32>
      %229 = arith.select %225, %192, %224 : vector<8x256xi1>, vector<8x256xf32>
      %230 = arith.cmpf olt, %228, %196 : vector<8x256xf32>
      %231 = arith.select %230, %228, %196 : vector<8x256xi1>, vector<8x256xf32>
      %232 = arith.select %230, %229, %197 : vector<8x256xi1>, vector<8x256xf32>
      %233 = arith.select %230, %196, %228 : vector<8x256xi1>, vector<8x256xf32>
      %234 = arith.select %230, %197, %229 : vector<8x256xi1>, vector<8x256xf32>
      %235 = arith.cmpf olt, %233, %201 : vector<8x256xf32>
      %236 = arith.select %235, %233, %201 : vector<8x256xi1>, vector<8x256xf32>
      %237 = arith.select %235, %234, %202 : vector<8x256xi1>, vector<8x256xf32>
      %238 = arith.select %235, %201, %233 : vector<8x256xi1>, vector<8x256xf32>
      %239 = arith.select %235, %202, %234 : vector<8x256xi1>, vector<8x256xf32>
      %240 = arith.cmpf olt, %238, %206 : vector<8x256xf32>
      %241 = arith.select %240, %238, %206 : vector<8x256xi1>, vector<8x256xf32>
      %242 = arith.select %240, %239, %207 : vector<8x256xi1>, vector<8x256xf32>
      %243 = arith.select %240, %206, %238 : vector<8x256xi1>, vector<8x256xf32>
      %244 = arith.select %240, %207, %239 : vector<8x256xi1>, vector<8x256xf32>
      %245 = arith.cmpf olt, %243, %211 : vector<8x256xf32>
      %246 = arith.select %245, %243, %211 : vector<8x256xi1>, vector<8x256xf32>
      %247 = arith.select %245, %244, %212 : vector<8x256xi1>, vector<8x256xf32>
      %c0_47 = arith.constant 0 : index
      %c6 = arith.constant 6 : index
      %248 = vector.load %arg3[%c0_47, %c6] : memref<8x24xf32, #tpu.memory_space<vmem>>, vector<8x1xf32>
      %c0_48 = arith.constant 0 : index
      %c14 = arith.constant 14 : index
      %249 = vector.load %arg3[%c0_48, %c14] : memref<8x24xf32, #tpu.memory_space<vmem>>, vector<8x1xf32>
      %c0_49 = arith.constant 0 : index
      %c22 = arith.constant 22 : index
      %250 = vector.load %arg3[%c0_49, %c22] : memref<8x24xf32, #tpu.memory_space<vmem>>, vector<8x1xf32>
      %251 = vector.broadcast %248 : vector<8x1xf32> to vector<8x256xf32>
      %252 = arith.subf %22, %251 : vector<8x256xf32>
      %253 = vector.broadcast %249 : vector<8x1xf32> to vector<8x256xf32>
      %254 = arith.subf %27, %253 : vector<8x256xf32>
      %255 = arith.mulf %252, %252 : vector<8x256xf32>
      %256 = arith.mulf %254, %254 : vector<8x256xf32>
      %257 = arith.addf %255, %256 : vector<8x256xf32>
      %258 = vector.shape_cast %250 : vector<8x1xf32> to vector<8x1xf32>
      %259 = vector.broadcast %258 : vector<8x1xf32> to vector<8x256xf32>
      %260 = arith.cmpf olt, %257, %226 : vector<8x256xf32>
      %261 = arith.select %260, %257, %226 : vector<8x256xi1>, vector<8x256xf32>
      %262 = arith.select %260, %259, %227 : vector<8x256xi1>, vector<8x256xf32>
      %263 = arith.select %260, %226, %257 : vector<8x256xi1>, vector<8x256xf32>
      %264 = arith.select %260, %227, %259 : vector<8x256xi1>, vector<8x256xf32>
      %265 = arith.cmpf olt, %263, %231 : vector<8x256xf32>
      %266 = arith.select %265, %263, %231 : vector<8x256xi1>, vector<8x256xf32>
      %267 = arith.select %265, %264, %232 : vector<8x256xi1>, vector<8x256xf32>
      %268 = arith.select %265, %231, %263 : vector<8x256xi1>, vector<8x256xf32>
      %269 = arith.select %265, %232, %264 : vector<8x256xi1>, vector<8x256xf32>
      %270 = arith.cmpf olt, %268, %236 : vector<8x256xf32>
      %271 = arith.select %270, %268, %236 : vector<8x256xi1>, vector<8x256xf32>
      %272 = arith.select %270, %269, %237 : vector<8x256xi1>, vector<8x256xf32>
      %273 = arith.select %270, %236, %268 : vector<8x256xi1>, vector<8x256xf32>
      %274 = arith.select %270, %237, %269 : vector<8x256xi1>, vector<8x256xf32>
      %275 = arith.cmpf olt, %273, %241 : vector<8x256xf32>
      %276 = arith.select %275, %273, %241 : vector<8x256xi1>, vector<8x256xf32>
      %277 = arith.select %275, %274, %242 : vector<8x256xi1>, vector<8x256xf32>
      %278 = arith.select %275, %241, %273 : vector<8x256xi1>, vector<8x256xf32>
      %279 = arith.select %275, %242, %274 : vector<8x256xi1>, vector<8x256xf32>
      %280 = arith.cmpf olt, %278, %246 : vector<8x256xf32>
      %281 = arith.select %280, %278, %246 : vector<8x256xi1>, vector<8x256xf32>
      %282 = arith.select %280, %279, %247 : vector<8x256xi1>, vector<8x256xf32>
      %c0_50 = arith.constant 0 : index
      %c7 = arith.constant 7 : index
      %283 = vector.load %arg3[%c0_50, %c7] : memref<8x24xf32, #tpu.memory_space<vmem>>, vector<8x1xf32>
      %c0_51 = arith.constant 0 : index
      %c15 = arith.constant 15 : index
      %284 = vector.load %arg3[%c0_51, %c15] : memref<8x24xf32, #tpu.memory_space<vmem>>, vector<8x1xf32>
      %c0_52 = arith.constant 0 : index
      %c23 = arith.constant 23 : index
      %285 = vector.load %arg3[%c0_52, %c23] : memref<8x24xf32, #tpu.memory_space<vmem>>, vector<8x1xf32>
      %286 = vector.broadcast %283 : vector<8x1xf32> to vector<8x256xf32>
      %287 = arith.subf %22, %286 : vector<8x256xf32>
      %288 = vector.broadcast %284 : vector<8x1xf32> to vector<8x256xf32>
      %289 = arith.subf %27, %288 : vector<8x256xf32>
      %290 = arith.mulf %287, %287 : vector<8x256xf32>
      %291 = arith.mulf %289, %289 : vector<8x256xf32>
      %292 = arith.addf %290, %291 : vector<8x256xf32>
      %293 = vector.shape_cast %285 : vector<8x1xf32> to vector<8x1xf32>
      %294 = vector.broadcast %293 : vector<8x1xf32> to vector<8x256xf32>
      %295 = arith.cmpf olt, %292, %261 : vector<8x256xf32>
      %296 = arith.select %295, %292, %261 : vector<8x256xi1>, vector<8x256xf32>
      %297 = arith.select %295, %294, %262 : vector<8x256xi1>, vector<8x256xf32>
      %298 = arith.select %295, %261, %292 : vector<8x256xi1>, vector<8x256xf32>
      %299 = arith.select %295, %262, %294 : vector<8x256xi1>, vector<8x256xf32>
      %300 = arith.cmpf olt, %298, %266 : vector<8x256xf32>
      %301 = arith.select %300, %298, %266 : vector<8x256xi1>, vector<8x256xf32>
      %302 = arith.select %300, %299, %267 : vector<8x256xi1>, vector<8x256xf32>
      %303 = arith.select %300, %266, %298 : vector<8x256xi1>, vector<8x256xf32>
      %304 = arith.select %300, %267, %299 : vector<8x256xi1>, vector<8x256xf32>
      %305 = arith.cmpf olt, %303, %271 : vector<8x256xf32>
      %306 = arith.select %305, %303, %271 : vector<8x256xi1>, vector<8x256xf32>
      %307 = arith.select %305, %304, %272 : vector<8x256xi1>, vector<8x256xf32>
      %308 = arith.select %305, %271, %303 : vector<8x256xi1>, vector<8x256xf32>
      %309 = arith.select %305, %272, %304 : vector<8x256xi1>, vector<8x256xf32>
      %310 = arith.cmpf olt, %308, %276 : vector<8x256xf32>
      %311 = arith.select %310, %308, %276 : vector<8x256xi1>, vector<8x256xf32>
      %312 = arith.select %310, %309, %277 : vector<8x256xi1>, vector<8x256xf32>
      %313 = arith.select %310, %276, %308 : vector<8x256xi1>, vector<8x256xf32>
      %314 = arith.select %310, %277, %309 : vector<8x256xi1>, vector<8x256xf32>
      %315 = arith.cmpf olt, %313, %281 : vector<8x256xf32>
      %316 = arith.select %315, %313, %281 : vector<8x256xi1>, vector<8x256xf32>
      %317 = arith.select %315, %314, %282 : vector<8x256xi1>, vector<8x256xf32>
      %cst_53 = arith.constant 0.000000e+00 : f32
      %318 = vector.broadcast %cst_53 : f32 to vector<8x256xf32>
      %cst_54 = arith.constant 0.000000e+00 : f32
      %319 = vector.broadcast %cst_54 : f32 to vector<8x256xf32>
      %cst_55 = arith.constant -5.000000e-01 : f32
      %320 = vector.broadcast %cst_55 : f32 to vector<8x256xf32>
      %321 = arith.mulf %296, %320 : vector<8x256xf32>
      %322 = math.exp %321 : vector<8x256xf32>
      %323 = arith.mulf %322, %297 : vector<8x256xf32>
      %324 = arith.addf %318, %323 : vector<8x256xf32>
      %325 = arith.addf %319, %322 : vector<8x256xf32>
      %cst_56 = arith.constant -5.000000e-01 : f32
      %326 = vector.broadcast %cst_56 : f32 to vector<8x256xf32>
      %327 = arith.mulf %301, %326 : vector<8x256xf32>
      %328 = math.exp %327 : vector<8x256xf32>
      %329 = arith.mulf %328, %302 : vector<8x256xf32>
      %330 = arith.addf %324, %329 : vector<8x256xf32>
      %331 = arith.addf %325, %328 : vector<8x256xf32>
      %cst_57 = arith.constant -5.000000e-01 : f32
      %332 = vector.broadcast %cst_57 : f32 to vector<8x256xf32>
      %333 = arith.mulf %306, %332 : vector<8x256xf32>
      %334 = math.exp %333 : vector<8x256xf32>
      %335 = arith.mulf %334, %307 : vector<8x256xf32>
      %336 = arith.addf %330, %335 : vector<8x256xf32>
      %337 = arith.addf %331, %334 : vector<8x256xf32>
      %cst_58 = arith.constant -5.000000e-01 : f32
      %338 = vector.broadcast %cst_58 : f32 to vector<8x256xf32>
      %339 = arith.mulf %311, %338 : vector<8x256xf32>
      %340 = math.exp %339 : vector<8x256xf32>
      %341 = arith.mulf %340, %312 : vector<8x256xf32>
      %342 = arith.addf %336, %341 : vector<8x256xf32>
      %343 = arith.addf %337, %340 : vector<8x256xf32>
      %cst_59 = arith.constant -5.000000e-01 : f32
      %344 = vector.broadcast %cst_59 : f32 to vector<8x256xf32>
      %345 = arith.mulf %316, %344 : vector<8x256xf32>
      %346 = math.exp %345 : vector<8x256xf32>
      %347 = arith.mulf %346, %317 : vector<8x256xf32>
      %348 = arith.addf %342, %347 : vector<8x256xf32>
      %349 = arith.addf %343, %346 : vector<8x256xf32>
      %350 = tpu.reciprocal %349 {approx = true} : vector<8x256xf32> -> vector<8x256xf32>
      %351 = arith.mulf %348, %350 : vector<8x256xf32>
      %c0_60 = arith.constant 0 : index
      %352 = arith.index_cast %17 : i32 to index
      %353 = vector.load %arg10[%c0_60, %352] : memref<8x1024xf32, #tpu.memory_space<vmem>>, vector<8x256xf32>
      tpu.vector_store %arg10[%c0_60, %352], %351 {strides = array<i32>} : memref<8x1024xf32, #tpu.memory_space<vmem>>, vector<8x256xf32>,
    }
    %c4_i32_2 = arith.constant 4 : i32
    %c0 = arith.constant 0 : index
    %c0_3 = arith.constant 0 : index
    %4 = vector.load %arg11[%c0, %c0_3] : memref<8x128xf32, #tpu.memory_space<vmem>>, vector<8x128xf32>
    %c0_4 = arith.constant 0 : index
    %c0_5 = arith.constant 0 : index
    %5 = vector.load %arg10[%c0_4, %c0_5] : memref<8x1024xf32, #tpu.memory_space<vmem>>, vector<8x1024xf32>
    %6 = arith.truncf %5 : vector<8x1024xf32> to vector<8x1024xbf16>
    %c0_6 = arith.constant 0 : index
    %c0_7 = arith.constant 0 : index
    %7 = vector.load %arg6[%c0_6, %c0_7] : memref<1024x128xbf16, #tpu.memory_space<vmem>>, vector<1024x128xbf16>
    %cst = arith.constant dense<0.000000e+00> : vector<8x128xf32>
    %8 = tpu.matmul %6, %7, %cst {dimension_numbers = #tpu.dot_dimension_numbers<[1], [0], [0], [1], [0, 0, 1, 1], [], []>} : vector<8x1024xbf16>, vector<1024x128xbf16>, vector<8x128xf32> -> vector<8x128xf32>
    %9 = arith.addf %4, %8 : vector<8x128xf32>
    %c0_8 = arith.constant 0 : index
    %c0_9 = arith.constant 0 : index
    %10 = vector.load %arg11[%c0_8, %c0_9] : memref<8x128xf32, #tpu.memory_space<vmem>>, vector<8x128xf32>
    tpu.vector_store %arg11[%c0_8, %c0_9], %9 {strides = array<i32>} : memref<8x128xf32, #tpu.memory_space<vmem>>, vector<8x128xf32>,
    %c0_i32_10 = arith.constant 0 : i32
    %11 = arith.cmpi eq, %arg2, %c0_i32_10 : i32
    %12 = arith.extui %11 : i1 to i32
    %c0_i32_11 = arith.constant 0 : i32
    %13 = arith.cmpi ne, %12, %c0_i32_11 : i32
    scf.if %13 {
      %c0_12 = arith.constant 0 : index
      %c0_13 = arith.constant 0 : index
      %14 = vector.load %arg11[%c0_12, %c0_13] : memref<8x128xf32, #tpu.memory_space<vmem>>, vector<8x128xf32>
      %c0_14 = arith.constant 0 : index
      %c0_15 = arith.constant 0 : index
      %15 = vector.load %arg7[%c0_14, %c0_15] : memref<8x128xf32, #tpu.memory_space<vmem>>, vector<8x128xf32>
      %16 = arith.subf %14, %15 : vector<8x128xf32>
      %17 = arith.mulf %16, %16 : vector<8x128xf32>
      %c0_16 = arith.constant 0 : index
      %c0_17 = arith.constant 0 : index
      %18 = vector.load %arg8[%c0_16, %c0_17] : memref<1x128xf32, #tpu.memory_space<vmem>>, vector<1x128xf32>
      %19 = vector.broadcast %18 : vector<1x128xf32> to vector<8x128xf32>
      %20 = arith.mulf %17, %19 : vector<8x128xf32>
      %c0_18 = arith.constant 0 : index
      %c0_19 = arith.constant 0 : index
      %21 = vector.load %arg9[%c0_18, %c0_19] : memref<8x128xf32, #tpu.memory_space<vmem>>, vector<8x128xf32>
      tpu.vector_store %arg9[%c0_18, %c0_19], %20 {strides = array<i32>} : memref<8x128xf32, #tpu.memory_space<vmem>>, vector<8x128xf32>,
    } else {
    }
    return
  }
  func.func @transform_0(%arg0: i32, %arg1: i32, %arg2: i32) -> (i32, i32) {
    %c0_i32 = arith.constant 0 : i32
    %c0_i32_0 = arith.constant 0 : i32
    return %arg0, %c0_i32 : i32, i32
  }
  func.func @transform_1(%arg0: i32, %arg1: i32, %arg2: i32) -> (i32, i32, i32) {
    %c0_i32 = arith.constant 0 : i32
    %c0_i32_0 = arith.constant 0 : i32
    %c0_i32_1 = arith.constant 0 : i32
    return %arg2, %c0_i32, %c0_i32_0 : i32, i32, i32
  }
  func.func @transform_2(%arg0: i32, %arg1: i32, %arg2: i32) -> (i32, i32, i32) {
    %c0_i32 = arith.constant 0 : i32
    %c0_i32_0 = arith.constant 0 : i32
    %c0_i32_1 = arith.constant 0 : i32
    return %arg2, %c0_i32, %c0_i32_0 : i32, i32, i32
  }
  func.func @transform_3(%arg0: i32, %arg1: i32, %arg2: i32) -> (i32, i32) {
    %c0_i32 = arith.constant 0 : i32
    return %arg2, %arg1 : i32, i32
  }
  func.func @transform_4(%arg0: i32, %arg1: i32, %arg2: i32) -> (i32, i32) {
    %c0_i32 = arith.constant 0 : i32
    return %arg0, %arg1 : i32, i32
  }
  func.func @transform_5(%arg0: i32, %arg1: i32, %arg2: i32) -> (i32, i32) {
    %c0_i32 = arith.constant 0 : i32
    %c0_i32_0 = arith.constant 0 : i32
    return %c0_i32, %arg1 : i32, i32
  }
  func.func @transform_6(%arg0: i32, %arg1: i32, %arg2: i32) -> (i32, i32) {
    %c0_i32 = arith.constant 0 : i32
    return %arg0, %arg1 : i32, i32
  }
}

</mosaic_0001>

<llo_original>
// kernel: a_call__.1
$region0: #{a_call__.1}
  #allocation0 [shape = 'u32[]', space=smem, size = 0x4, offset = 0x4, fixed_abs, tag = 'smem constant byte address 0x4 - core index']
  #allocation1 [shape = 'u32[144,128]{1,0:T(1,128)}', space=vmem, size = 0x12000, scoped, tag = 'internal scratch']
  #allocation2 [shape = 'f32[8,1024]{1,0:T(8,128)}', space=vmem, size = 0x8000, scoped, tag = 'scratch operand']
  #allocation3 [shape = 'f32[8,128]{1,0:T(8,128)}', space=vmem, size = 0x1000, scoped, tag = 'scratch operand']
  %s0 = inlined_call_operand.hbm [shape: f32[8,24], index: 0, kind: input, shape index: {}]
  %s1 = inlined_call_operand.hbm [shape: f32[1,1,1024], index: 1, kind: input, shape index: {}]
  %s2 = inlined_call_operand.hbm [shape: f32[1,1,1024], index: 2, kind: input, shape index: {}]
  %s3 = inlined_call_operand.hbm [shape: bf16[1024,128], index: 3, kind: input, shape index: {}]
  %s4 = inlined_call_operand.hbm [shape: f32[8,128], index: 4, kind: input, shape index: {}]
  %s5 = inlined_call_operand.hbm [shape: f32[1,128], index: 5, kind: input, shape index: {}]
  %s6 = inlined_call_operand.hbm [shape: f32[8,128], index: 6, kind: output, shape index: {}]
  %s7 = sld [smem:[#allocation0]]
  $region73: #{a_call__.1} parent=0
    _
  %s9 = ssub.s32 1, %s7
  %s10 = scalar_select 0, %s9, %s7
  $region1: #{a_call__.1} parent=0
    #allocation4 [shape = 'u8[4096]{0}', space=vmem, size = 0x1000, scoped, tag = 'input window, operand 0, single buffered']
    #allocation5 [shape = 's32[1]{0}', space=sflag, size = 0x4, scoped, tag = 'scoped memory for a_call__.1']
    #allocation6 [shape = 's32[1]{0}', space=sflag, size = 0x4, scoped, tag = 'scoped memory for a_call__.1']
    #allocation7 [shape = 'u8[4096]{0}', space=vmem, size = 0x1000, scoped, tag = 'input window, operand 1, single buffered']
    #allocation8 [shape = 's32[1]{0}', space=sflag, size = 0x4, scoped, tag = 'scoped memory for a_call__.1']
    #allocation9 [shape = 'u8[4096]{0}', space=vmem, size = 0x1000, scoped, tag = 'input window, operand 2, single buffered']
    #allocation10 [shape = 'u8[262144]{0}', space=vmem, size = 0x40000, scoped, tag = 'input window, operand 3, single buffered']
    #allocation11 [shape = 's32[1]{0}', space=sflag, size = 0x4, scoped, tag = 'scoped memory for a_call__.1']
    #allocation12 [shape = 'u8[4096]{0}', space=vmem, size = 0x1000, scoped, tag = 'input window, operand 4, single buffered']
    #allocation13 [shape = 'u8[512]{0}', space=vmem, size = 0x400, scoped, tag = 'input window, operand 5, single buffered']
    #allocation14 [shape = 's32[1]{0}', space=sflag, size = 0x4, scoped, tag = 'scoped memory for a_call__.1']
    #allocation15 [shape = 'u8[4096]{0}', space=vmem, size = 0x1000, scoped, tag = 'output window, operand 0, single buffered']
    %11 = vsyncpa [#allocation5], 0
    %12 = vsyncpa [#allocation8], 0
    %13 = vsyncpa [#allocation11], 0
    %14 = vsyncpa [#allocation14], 0
    %15 = vsyncpa [#allocation6], 0
    // Predicated region
    $region2: #{a_call__.1} parent=1 // pred_check
      _
    $region3: #{a_call__.1} parent=1 // pred_check_branch
      %17 = sbr.rel (0) target = $region5
    $region4: #{a_call__.1} parent=1 // pred_region
      %s19 = ssub.s32 128, 128
      %20 = vsyncadd [#allocation5], %s19
      %s22 = sshll.u32 [#allocation4], 4
      %s23 = int_to_ptr.vmem [resolvable:$true] %s22
      %25 = dma.hbm_to_vmem [thread:$0]  %s0, 128, %s23, [#allocation5]
    $region5: #{a_call__.1} parent=1 // pred_fallthru
      _
    // Predicated region
    $region6: #{a_call__.1} parent=1 // pred_check
      _
    $region7: #{a_call__.1} parent=1 // pred_check_branch
      %27 = sbr.rel (0) target = $region9
    $region8: #{a_call__.1} parent=1 // pred_region
      %s29 = ssub.s32 128, 128
      %30 = vsyncadd [#allocation8], %s29
      %s32 = sshll.u32 [#allocation7], 4
      %s33 = int_to_ptr.vmem [resolvable:$true] %s32
      %35 = dma.hbm_to_vmem [thread:$0]  %s1, 128, %s33, [#allocation8]
    $region9: #{a_call__.1} parent=1 // pred_fallthru
      _
    // Predicated region
    $region10: #{a_call__.1} parent=1 // pred_check
      _
    $region11: #{a_call__.1} parent=1 // pred_check_branch
      %37 = sbr.rel (0) target = $region13
    $region12: #{a_call__.1} parent=1 // pred_region
      %s39 = ssub.s32 128, 128
      %40 = vsyncadd [#allocation8], %s39
      %s42 = sshll.u32 [#allocation9], 4
      %s43 = int_to_ptr.vmem [resolvable:$true] %s42
      %45 = dma.hbm_to_vmem [thread:$0]  %s2, 128, %s43, [#allocation8]
    $region13: #{a_call__.1} parent=1 // pred_fallthru
      _
    // Predicated region
    $region14: #{a_call__.1} parent=1 // pred_check
      _
    $region15: #{a_call__.1} parent=1 // pred_check_branch
      %47 = sbr.rel (0) target = $region17
    $region16: #{a_call__.1} parent=1 // pred_region
      %s49 = ssub.s32 8192, 8192
      %50 = vsyncadd [#allocation11], %s49
      %s51 = sshll.u32 [#allocation10], 4
      %s52 = int_to_ptr.vmem [resolvable:$true] %s51
      %57 = dma.hbm_to_vmem [thread:$0]  %s3, 8192, %s52, [#allocation11], 64, 64, 4
    $region17: #{a_call__.1} parent=1 // pred_fallthru
      _
    // Predicated region
    $region18: #{a_call__.1} parent=1 // pred_check
      _
    $region19: #{a_call__.1} parent=1 // pred_check_branch
      %59 = sbr.rel (0) target = $region21
    $region20: #{a_call__.1} parent=1 // pred_region
      %s61 = ssub.s32 128, 128
      %62 = vsyncadd [#allocation11], %s61
      %s64 = sshll.u32 [#allocation12], 4
      %s65 = int_to_ptr.vmem [resolvable:$true] %s64
      %67 = dma.hbm_to_vmem [thread:$0]  %s4, 128, %s65, [#allocation11]
    $region21: #{a_call__.1} parent=1 // pred_fallthru
      _
    // Predicated region
    $region22: #{a_call__.1} parent=1 // pred_check
      _
    $region23: #{a_call__.1} parent=1 // pred_check_branch
      %69 = sbr.rel (0) target = $region25
    $region24: #{a_call__.1} parent=1 // pred_region
      %s71 = ssub.s32 16, 16
      %72 = vsyncadd [#allocation14], %s71
      %s74 = sshll.u32 [#allocation13], 4
      %s75 = int_to_ptr.vmem [resolvable:$true] %s74
      %77 = dma.hbm_to_vmem [thread:$0]  %s5, 16, %s75, [#allocation14]
    $region25: #{a_call__.1} parent=1 // pred_fallthru
      _
    // Predicated region
    $region26: #{a_call__.1} parent=1 // pred_check
      _
    $region27: #{a_call__.1} parent=1 // pred_check_branch
      %79 = sbr.rel (0) target = $region29
    $region28: #{a_call__.1} parent=1 // pred_region
      %80 = dma.done [#allocation5], 128
    $region29: #{a_call__.1} parent=1 // pred_fallthru
      _
    // Predicated region
    $region30: #{a_call__.1} parent=1 // pred_check
      _
    $region31: #{a_call__.1} parent=1 // pred_check_branch
      %82 = sbr.rel (0) target = $region33
    $region32: #{a_call__.1} parent=1 // pred_region
      %83 = dma.done [#allocation8], 128
    $region33: #{a_call__.1} parent=1 // pred_fallthru
      _
    // Predicated region
    $region34: #{a_call__.1} parent=1 // pred_check
      _
    $region35: #{a_call__.1} parent=1 // pred_check_branch
      %85 = sbr.rel (0) target = $region37
    $region36: #{a_call__.1} parent=1 // pred_region
      %86 = dma.done [#allocation8], 128
    $region37: #{a_call__.1} parent=1 // pred_fallthru
      _
    // Predicated region
    $region38: #{a_call__.1} parent=1 // pred_check
      _
    $region39: #{a_call__.1} parent=1 // pred_check_branch
      %88 = sbr.rel (0) target = $region41
    $region40: #{a_call__.1} parent=1 // pred_region
      %89 = dma.done [#allocation11], 8192
    $region41: #{a_call__.1} parent=1 // pred_fallthru
      _
    // Predicated region
    $region42: #{a_call__.1} parent=1 // pred_check
      _
    $region43: #{a_call__.1} parent=1 // pred_check_branch
      %91 = sbr.rel (0) target = $region45
    $region44: #{a_call__.1} parent=1 // pred_region
      %92 = dma.done [#allocation11], 128
    $region45: #{a_call__.1} parent=1 // pred_fallthru
      _
    // Predicated region
    $region46: #{a_call__.1} parent=1 // pred_check
      _
    $region47: #{a_call__.1} parent=1 // pred_check_branch
      %94 = sbr.rel (0) target = $region49
    $region48: #{a_call__.1} parent=1 // pred_region
      %95 = dma.done [#allocation14], 16
    $region49: #{a_call__.1} parent=1 // pred_fallthru
      _
    %p97 = scmp.eq.s32.totalorder 0, 0
    // Predicated region
    $region50: #{a_call__.1} parent=1 // pred_check
      %p98 = pneg %p97
    $region51: #{a_call__.1} parent=1 // pred_check_branch
      %100 = sbr.rel (%p98) target = $region53
    $region52: #{a_call__.1} parent=1 // pred_region
      %101 = vst [vmem:[#allocation3] sm:$0xff] 0.0
    $region53: #{a_call__.1} parent=1 // pred_fallthru
      _
    loop: start=0, step=1, limit=4
    $region54: #{a_call__.1} parent=1 // loop_pre_header
      _
    $region55: #{a_call__.1} parent=1 // loop_header
      %s103 = sphi 0, %s107
      %p104 = scmp.ge.s32.totalorder %s103, 4
    $region56: #{a_call__.1} parent=1 // loop_header_branch
      %106 = sbr.rel (%p104) target = $region60
    $region57: #{a_call__.1} parent=1 // loop_body
      %s108 = smul.u32 %s103, 256
      %s109 = sshra.s32 %s108, 7
      %s110 = sand.u32 %s108, 127
      %s111 = scalar_lea.vmem [#allocation7], %s109
      %v112 = vld [vmem:[%s111] sm:$0x3]
      %v114 = vlaneseq
      %v115 = vshrl.u32 %v114, 7
      %v116 = vsub.s32 0, %v115
      %v117 = vrot.slane %v112, %v116
      %v118 = vlaneseq
      %v119 = vshrl.u32 %v118, 7
      %v120 = vsub.s32 1, %v119
      %v121 = vrot.slane %v112, %v120
      %s124 = scalar_lea.vmem [#allocation9], %s109
      %v125 = vld [vmem:[%s124] sm:$0x3]
      %v127 = vlaneseq
      %v128 = vshrl.u32 %v127, 7
      %v129 = vsub.s32 0, %v128
      %v130 = vrot.slane %v125, %v129
      %v131 = vlaneseq
      %v132 = vshrl.u32 %v131, 7
      %v133 = vsub.s32 1, %v132
      %v134 = vrot.slane %v125, %v133
      %v137 = vld [vmem:[#allocation4] sm:$0xff]
      %139 = vset.pattern.permute.xlu0 0
      %140 = vperm.xlu0 %139, %v137
      %v141 = vpop.permute.xlu0 %140
      %v143 = vsub.f32 %v117, %v141
      %v144 = vsub.f32 %v121, %v141
      %145 = vset.pattern.permute.xlu0 8
      %146 = vperm.xlu0 %145, %v137
      %v147 = vpop.permute.xlu0 %146
      %v149 = vsub.f32 %v130, %v147
      %v150 = vsub.f32 %v134, %v147
      %v151 = vmul.f32 %v143, %v143
      %v152 = vmul.f32 %v144, %v144
      %v153 = vmul.f32 %v149, %v149
      %v154 = vmul.f32 %v150, %v150
      %v155 = vadd.f32 %v151, %v153
      %v156 = vadd.f32 %v152, %v154
      %157 = vset.pattern.permute.xlu0 16
      %158 = vperm.xlu0 %157, %v137
      %v159 = vpop.permute.xlu0 %158
      %vm161 = vcmp.lt.f32.partialorder %v155, 1e+30
      %vm162 = vcmp.lt.f32.partialorder %v156, 1e+30
      %v163 = vsel %vm161, %v155, 1e+30
      %v164 = vsel %vm162, %v156, 1e+30
      %v165 = vsel %vm161, %v159, 0.0
      %v166 = vsel %vm162, %v159, 0.0
      %v167 = vsel %vm161, 1e+30, %v155
      %v168 = vsel %vm162, 1e+30, %v156
      %v169 = vsel %vm161, 0.0, %v159
      %v170 = vsel %vm162, 0.0, %v159
      %vm171 = vcmp.lt.f32.partialorder %v167, 1e+30
      %vm172 = vcmp.lt.f32.partialorder %v168, 1e+30
      %v173 = vsel %vm171, %v167, 1e+30
      %v174 = vsel %vm172, %v168, 1e+30
      %v175 = vsel %vm171, %v169, 0.0
      %v176 = vsel %vm172, %v170, 0.0
      %v177 = vsel %vm171, 1e+30, %v167
      %v178 = vsel %vm172, 1e+30, %v168
      %v179 = vsel %vm171, 0.0, %v169
      %v180 = vsel %vm172, 0.0, %v170
      %vm181 = vcmp.lt.f32.partialorder %v177, 1e+30
      %vm182 = vcmp.lt.f32.partialorder %v178, 1e+30
      %v183 = vsel %vm181, %v177, 1e+30
      %v184 = vsel %vm182, %v178, 1e+30
      %v185 = vsel %vm181, %v179, 0.0
      %v186 = vsel %vm182, %v180, 0.0
      %v187 = vsel %vm181, 1e+30, %v177
      %v188 = vsel %vm182, 1e+30, %v178
      %v189 = vsel %vm181, 0.0, %v179
      %v190 = vsel %vm182, 0.0, %v180
      %vm191 = vcmp.lt.f32.partialorder %v187, 1e+30
      %vm192 = vcmp.lt.f32.partialorder %v188, 1e+30
      %v193 = vsel %vm191, %v187, 1e+30
      %v194 = vsel %vm192, %v188, 1e+30
      %v195 = vsel %vm191, %v189, 0.0
      %v196 = vsel %vm192, %v190, 0.0
      %v197 = vsel %vm191, 1e+30, %v187
      %v198 = vsel %vm192, 1e+30, %v188
      %v199 = vsel %vm191, 0.0, %v189
      %v200 = vsel %vm192, 0.0, %v190
      %vm201 = vcmp.lt.f32.partialorder %v197, 1e+30
      %vm202 = vcmp.lt.f32.partialorder %v198, 1e+30
      %v203 = vsel %vm201, %v197, 1e+30
      %v204 = vsel %vm202, %v198, 1e+30
      %v205 = vsel %vm201, %v199, 0.0
      %v206 = vsel %vm202, %v200, 0.0
      %207 = vset.pattern.permute.xlu0 1
      %208 = vperm.xlu0 %207, %v137
      %v209 = vpop.permute.xlu0 %208
      %v211 = vsub.f32 %v117, %v209
      %v212 = vsub.f32 %v121, %v209
      %213 = vset.pattern.permute.xlu0 9
      %214 = vperm.xlu0 %213, %v137
      %v215 = vpop.permute.xlu0 %214
      %v217 = vsub.f32 %v130, %v215
      %v218 = vsub.f32 %v134, %v215
      %v219 = vmul.f32 %v211, %v211
      %v220 = vmul.f32 %v212, %v212
      %v221 = vmul.f32 %v217, %v217
      %v222 = vmul.f32 %v218, %v218
      %v223 = vadd.f32 %v219, %v221
      %v224 = vadd.f32 %v220, %v222
      %225 = vset.pattern.permute.xlu0 17
      %226 = vperm.xlu0 %225, %v137
      %v227 = vpop.permute.xlu0 %226
      %vm229 = vcmp.lt.f32.partialorder %v223, %v163
      %vm230 = vcmp.lt.f32.partialorder %v224, %v164
      %v231 = vsel %vm229, %v223, %v163
      %v232 = vsel %vm230, %v224, %v164
      %v233 = vsel %vm229, %v227, %v165
      %v234 = vsel %vm230, %v227, %v166
      %v235 = vsel %vm229, %v163, %v223
      %v236 = vsel %vm230, %v164, %v224
      %v237 = vsel %vm229, %v165, %v227
      %v238 = vsel %vm230, %v166, %v227
      %vm239 = vcmp.lt.f32.partialorder %v235, %v173
      %vm240 = vcmp.lt.f32.partialorder %v236, %v174
      %v241 = vsel %vm239, %v235, %v173
      %v242 = vsel %vm240, %v236, %v174
      %v243 = vsel %vm239, %v237, %v175
      %v244 = vsel %vm240, %v238, %v176
      %v245 = vsel %vm239, %v173, %v235
      %v246 = vsel %vm240, %v174, %v236
      %v247 = vsel %vm239, %v175, %v237
      %v248 = vsel %vm240, %v176, %v238
      %vm249 = vcmp.lt.f32.partialorder %v245, %v183
      %vm250 = vcmp.lt.f32.partialorder %v246, %v184
      %v251 = vsel %vm249, %v245, %v183
      %v252 = vsel %vm250, %v246, %v184
      %v253 = vsel %vm249, %v247, %v185
      %v254 = vsel %vm250, %v248, %v186
      %v255 = vsel %vm249, %v183, %v245
      %v256 = vsel %vm250, %v184, %v246
      %v257 = vsel %vm249, %v185, %v247
      %v258 = vsel %vm250, %v186, %v248
      %vm259 = vcmp.lt.f32.partialorder %v255, %v193
      %vm260 = vcmp.lt.f32.partialorder %v256, %v194
      %v261 = vsel %vm259, %v255, %v193
      %v262 = vsel %vm260, %v256, %v194
      %v263 = vsel %vm259, %v257, %v195
      %v264 = vsel %vm260, %v258, %v196
      %v265 = vsel %vm259, %v193, %v255
      %v266 = vsel %vm260, %v194, %v256
      %v267 = vsel %vm259, %v195, %v257
      %v268 = vsel %vm260, %v196, %v258
      %vm269 = vcmp.lt.f32.partialorder %v265, %v203
      %vm270 = vcmp.lt.f32.partialorder %v266, %v204
      %v271 = vsel %vm269, %v265, %v203
      %v272 = vsel %vm270, %v266, %v204
      %v273 = vsel %vm269, %v267, %v205
      %v274 = vsel %vm270, %v268, %v206
      %275 = vset.pattern.permute.xlu0 2
      %276 = vperm.xlu0 %275, %v137
      %v277 = vpop.permute.xlu0 %276
      %v279 = vsub.f32 %v117, %v277
      %v280 = vsub.f32 %v121, %v277
      %281 = vset.pattern.permute.xlu0 10
      %282 = vperm.xlu0 %281, %v137
      %v283 = vpop.permute.xlu0 %282
      %v285 = vsub.f32 %v130, %v283
      %v286 = vsub.f32 %v134, %v283
      %v287 = vmul.f32 %v279, %v279
      %v288 = vmul.f32 %v280, %v280
      %v289 = vmul.f32 %v285, %v285
      %v290 = vmul.f32 %v286, %v286
      %v291 = vadd.f32 %v287, %v289
      %v292 = vadd.f32 %v288, %v290
      %293 = vset.pattern.permute.xlu0 18
      %294 = vperm.xlu0 %293, %v137
      %v295 = vpop.permute.xlu0 %294
      %vm297 = vcmp.lt.f32.partialorder %v291, %v231
      %vm298 = vcmp.lt.f32.partialorder %v292, %v232
      %v299 = vsel %vm297, %v291, %v231
      %v300 = vsel %vm298, %v292, %v232
      %v301 = vsel %vm297, %v295, %v233
      %v302 = vsel %vm298, %v295, %v234
      %v303 = vsel %vm297, %v231, %v291
      %v304 = vsel %vm298, %v232, %v292
      %v305 = vsel %vm297, %v233, %v295
      %v306 = vsel %vm298, %v234, %v295
      %vm307 = vcmp.lt.f32.partialorder %v303, %v241
      %vm308 = vcmp.lt.f32.partialorder %v304, %v242
      %v309 = vsel %vm307, %v303, %v241
      %v310 = vsel %vm308, %v304, %v242
      %v311 = vsel %vm307, %v305, %v243
      %v312 = vsel %vm308, %v306, %v244
      %v313 = vsel %vm307, %v241, %v303
      %v314 = vsel %vm308, %v242, %v304
      %v315 = vsel %vm307, %v243, %v305
      %v316 = vsel %vm308, %v244, %v306
      %vm317 = vcmp.lt.f32.partialorder %v313, %v251
      %vm318 = vcmp.lt.f32.partialorder %v314, %v252
      %v319 = vsel %vm317, %v313, %v251
      %v320 = vsel %vm318, %v314, %v252
      %v321 = vsel %vm317, %v315, %v253
      %v322 = vsel %vm318, %v316, %v254
      %v323 = vsel %vm317, %v251, %v313
      %v324 = vsel %vm318, %v252, %v314
      %v325 = vsel %vm317, %v253, %v315
      %v326 = vsel %vm318, %v254, %v316
      %vm327 = vcmp.lt.f32.partialorder %v323, %v261
      %vm328 = vcmp.lt.f32.partialorder %v324, %v262
      %v329 = vsel %vm327, %v323, %v261
      %v330 = vsel %vm328, %v324, %v262
      %v331 = vsel %vm327, %v325, %v263
      %v332 = vsel %vm328, %v326, %v264
      %v333 = vsel %vm327, %v261, %v323
      %v334 = vsel %vm328, %v262, %v324
      %v335 = vsel %vm327, %v263, %v325
      %v336 = vsel %vm328, %v264, %v326
      %vm337 = vcmp.lt.f32.partialorder %v333, %v271
      %vm338 = vcmp.lt.f32.partialorder %v334, %v272
      %v339 = vsel %vm337, %v333, %v271
      %v340 = vsel %vm338, %v334, %v272
      %v341 = vsel %vm337, %v335, %v273
      %v342 = vsel %vm338, %v336, %v274
      %343 = vset.pattern.permute.xlu0 3
      %344 = vperm.xlu0 %343, %v137
      %v345 = vpop.permute.xlu0 %344
      %v347 = vsub.f32 %v117, %v345
      %v348 = vsub.f32 %v121, %v345
      %349 = vset.pattern.permute.xlu0 11
      %350 = vperm.xlu0 %349, %v137
      %v351 = vpop.permute.xlu0 %350
      %v353 = vsub.f32 %v130, %v351
      %v354 = vsub.f32 %v134, %v351
      %v355 = vmul.f32 %v347, %v347
      %v356 = vmul.f32 %v348, %v348
      %v357 = vmul.f32 %v353, %v353
      %v358 = vmul.f32 %v354, %v354
      %v359 = vadd.f32 %v355, %v357
      %v360 = vadd.f32 %v356, %v358
      %361 = vset.pattern.permute.xlu0 19
      %362 = vperm.xlu0 %361, %v137
      %v363 = vpop.permute.xlu0 %362
      %vm365 = vcmp.lt.f32.partialorder %v359, %v299
      %vm366 = vcmp.lt.f32.partialorder %v360, %v300
      %v367 = vsel %vm365, %v359, %v299
      %v368 = vsel %vm366, %v360, %v300
      %v369 = vsel %vm365, %v363, %v301
      %v370 = vsel %vm366, %v363, %v302
      %v371 = vsel %vm365, %v299, %v359
      %v372 = vsel %vm366, %v300, %v360
      %v373 = vsel %vm365, %v301, %v363
      %v374 = vsel %vm366, %v302, %v363
      %vm375 = vcmp.lt.f32.partialorder %v371, %v309
      %vm376 = vcmp.lt.f32.partialorder %v372, %v310
      %v377 = vsel %vm375, %v371, %v309
      %v378 = vsel %vm376, %v372, %v310
      %v379 = vsel %vm375, %v373, %v311
      %v380 = vsel %vm376, %v374, %v312
      %v381 = vsel %vm375, %v309, %v371
      %v382 = vsel %vm376, %v310, %v372
      %v383 = vsel %vm375, %v311, %v373
      %v384 = vsel %vm376, %v312, %v374
      %vm385 = vcmp.lt.f32.partialorder %v381, %v319
      %vm386 = vcmp.lt.f32.partialorder %v382, %v320
      %v387 = vsel %vm385, %v381, %v319
      %v388 = vsel %vm386, %v382, %v320
      %v389 = vsel %vm385, %v383, %v321
      %v390 = vsel %vm386, %v384, %v322
      %v391 = vsel %vm385, %v319, %v381
      %v392 = vsel %vm386, %v320, %v382
      %v393 = vsel %vm385, %v321, %v383
      %v394 = vsel %vm386, %v322, %v384
      %vm395 = vcmp.lt.f32.partialorder %v391, %v329
      %vm396 = vcmp.lt.f32.partialorder %v392, %v330
      %v397 = vsel %vm395, %v391, %v329
      %v398 = vsel %vm396, %v392, %v330
      %v399 = vsel %vm395, %v393, %v331
      %v400 = vsel %vm396, %v394, %v332
      %v401 = vsel %vm395, %v329, %v391
      %v402 = vsel %vm396, %v330, %v392
      %v403 = vsel %vm395, %v331, %v393
      %v404 = vsel %vm396, %v332, %v394
      %vm405 = vcmp.lt.f32.partialorder %v401, %v339
      %vm406 = vcmp.lt.f32.partialorder %v402, %v340
      %v407 = vsel %vm405, %v401, %v339
      %v408 = vsel %vm406, %v402, %v340
      %v409 = vsel %vm405, %v403, %v341
      %v410 = vsel %vm406, %v404, %v342
      %411 = vset.pattern.permute.xlu0 4
      %412 = vperm.xlu0 %411, %v137
      %v413 = vpop.permute.xlu0 %412
      %v415 = vsub.f32 %v117, %v413
      %v416 = vsub.f32 %v121, %v413
      %417 = vset.pattern.permute.xlu0 12
      %418 = vperm.xlu0 %417, %v137
      %v419 = vpop.permute.xlu0 %418
      %v421 = vsub.f32 %v130, %v419
      %v422 = vsub.f32 %v134, %v419
      %v423 = vmul.f32 %v415, %v415
      %v424 = vmul.f32 %v416, %v416
      %v425 = vmul.f32 %v421, %v421
      %v426 = vmul.f32 %v422, %v422
      %v427 = vadd.f32 %v423, %v425
      %v428 = vadd.f32 %v424, %v426
      %429 = vset.pattern.permute.xlu0 20
      %430 = vperm.xlu0 %429, %v137
      %v431 = vpop.permute.xlu0 %430
      %vm433 = vcmp.lt.f32.partialorder %v427, %v367
      %vm434 = vcmp.lt.f32.partialorder %v428, %v368
      %v435 = vsel %vm433, %v427, %v367
      %v436 = vsel %vm434, %v428, %v368
      %v437 = vsel %vm433, %v431, %v369
      %v438 = vsel %vm434, %v431, %v370
      %v439 = vsel %vm433, %v367, %v427
      %v440 = vsel %vm434, %v368, %v428
      %v441 = vsel %vm433, %v369, %v431
      %v442 = vsel %vm434, %v370, %v431
      %vm443 = vcmp.lt.f32.partialorder %v439, %v377
      %vm444 = vcmp.lt.f32.partialorder %v440, %v378
      %v445 = vsel %vm443, %v439, %v377
      %v446 = vsel %vm444, %v440, %v378
      %v447 = vsel %vm443, %v441, %v379
      %v448 = vsel %vm444, %v442, %v380
      %v449 = vsel %vm443, %v377, %v439
      %v450 = vsel %vm444, %v378, %v440
      %v451 = vsel %vm443, %v379, %v441
      %v452 = vsel %vm444, %v380, %v442
      %vm453 = vcmp.lt.f32.partialorder %v449, %v387
      %vm454 = vcmp.lt.f32.partialorder %v450, %v388
      %v455 = vsel %vm453, %v449, %v387
      %v456 = vsel %vm454, %v450, %v388
      %v457 = vsel %vm453, %v451, %v389
      %v458 = vsel %vm454, %v452, %v390
      %v459 = vsel %vm453, %v387, %v449
      %v460 = vsel %vm454, %v388, %v450
      %v461 = vsel %vm453, %v389, %v451
      %v462 = vsel %vm454, %v390, %v452
      %vm463 = vcmp.lt.f32.partialorder %v459, %v397
      %vm464 = vcmp.lt.f32.partialorder %v460, %v398
      %v465 = vsel %vm463, %v459, %v397
      %v466 = vsel %vm464, %v460, %v398
      %v467 = vsel %vm463, %v461, %v399
      %v468 = vsel %vm464, %v462, %v400
      %v469 = vsel %vm463, %v397, %v459
      %v470 = vsel %vm464, %v398, %v460
      %v471 = vsel %vm463, %v399, %v461
      %v472 = vsel %vm464, %v400, %v462
      %vm473 = vcmp.lt.f32.partialorder %v469, %v407
      %vm474 = vcmp.lt.f32.partialorder %v470, %v408
      %v475 = vsel %vm473, %v469, %v407
      %v476 = vsel %vm474, %v470, %v408
      %v477 = vsel %vm473, %v471, %v409
      %v478 = vsel %vm474, %v472, %v410
      %479 = vset.pattern.permute.xlu0 5
      %480 = vperm.xlu0 %479, %v137
      %v481 = vpop.permute.xlu0 %480
      %v483 = vsub.f32 %v117, %v481
      %v484 = vsub.f32 %v121, %v481
      %485 = vset.pattern.permute.xlu0 13
      %486 = vperm.xlu0 %485, %v137
      %v487 = vpop.permute.xlu0 %486
      %v489 = vsub.f32 %v130, %v487
      %v490 = vsub.f32 %v134, %v487
      %v491 = vmul.f32 %v483, %v483
      %v492 = vmul.f32 %v484, %v484
      %v493 = vmul.f32 %v489, %v489
      %v494 = vmul.f32 %v490, %v490
      %v495 = vadd.f32 %v491, %v493
      %v496 = vadd.f32 %v492, %v494
      %497 = vset.pattern.permute.xlu0 21
      %498 = vperm.xlu0 %497, %v137
      %v499 = vpop.permute.xlu0 %498
      %vm501 = vcmp.lt.f32.partialorder %v495, %v435
      %vm502 = vcmp.lt.f32.partialorder %v496, %v436
      %v503 = vsel %vm501, %v495, %v435
      %v504 = vsel %vm502, %v496, %v436
      %v505 = vsel %vm501, %v499, %v437
      %v506 = vsel %vm502, %v499, %v438
      %v507 = vsel %vm501, %v435, %v495
      %v508 = vsel %vm502, %v436, %v496
      %v509 = vsel %vm501, %v437, %v499
      %v510 = vsel %vm502, %v438, %v499
      %vm511 = vcmp.lt.f32.partialorder %v507, %v445
      %vm512 = vcmp.lt.f32.partialorder %v508, %v446
      %v513 = vsel %vm511, %v507, %v445
      %v514 = vsel %vm512, %v508, %v446
      %v515 = vsel %vm511, %v509, %v447
      %v516 = vsel %vm512, %v510, %v448
      %v517 = vsel %vm511, %v445, %v507
      %v518 = vsel %vm512, %v446, %v508
      %v519 = vsel %vm511, %v447, %v509
      %v520 = vsel %vm512, %v448, %v510
      %vm521 = vcmp.lt.f32.partialorder %v517, %v455
      %vm522 = vcmp.lt.f32.partialorder %v518, %v456
      %v523 = vsel %vm521, %v517, %v455
      %v524 = vsel %vm522, %v518, %v456
      %v525 = vsel %vm521, %v519, %v457
      %v526 = vsel %vm522, %v520, %v458
      %v527 = vsel %vm521, %v455, %v517
      %v528 = vsel %vm522, %v456, %v518
      %v529 = vsel %vm521, %v457, %v519
      %v530 = vsel %vm522, %v458, %v520
      %vm531 = vcmp.lt.f32.partialorder %v527, %v465
      %vm532 = vcmp.lt.f32.partialorder %v528, %v466
      %v533 = vsel %vm531, %v527, %v465
      %v534 = vsel %vm532, %v528, %v466
      %v535 = vsel %vm531, %v529, %v467
      %v536 = vsel %vm532, %v530, %v468
      %v537 = vsel %vm531, %v465, %v527
      %v538 = vsel %vm532, %v466, %v528
      %v539 = vsel %vm531, %v467, %v529
      %v540 = vsel %vm532, %v468, %v530
      %vm541 = vcmp.lt.f32.partialorder %v537, %v475
      %vm542 = vcmp.lt.f32.partialorder %v538, %v476
      %v543 = vsel %vm541, %v537, %v475
      %v544 = vsel %vm542, %v538, %v476
      %v545 = vsel %vm541, %v539, %v477
      %v546 = vsel %vm542, %v540, %v478
      %547 = vset.pattern.permute.xlu0 6
      %548 = vperm.xlu0 %547, %v137
      %v549 = vpop.permute.xlu0 %548
      %v551 = vsub.f32 %v117, %v549
      %v552 = vsub.f32 %v121, %v549
      %553 = vset.pattern.permute.xlu0 14
      %554 = vperm.xlu0 %553, %v137
      %v555 = vpop.permute.xlu0 %554
      %v557 = vsub.f32 %v130, %v555
      %v558 = vsub.f32 %v134, %v555
      %v559 = vmul.f32 %v551, %v551
      %v560 = vmul.f32 %v552, %v552
      %v561 = vmul.f32 %v557, %v557
      %v562 = vmul.f32 %v558, %v558
      %v563 = vadd.f32 %v559, %v561
      %v564 = vadd.f32 %v560, %v562
      %565 = vset.pattern.permute.xlu0 22
      %566 = vperm.xlu0 %565, %v137
      %v567 = vpop.permute.xlu0 %566
      %vm569 = vcmp.lt.f32.partialorder %v563, %v503
      %vm570 = vcmp.lt.f32.partialorder %v564, %v504
      %v571 = vsel %vm569, %v563, %v503
      %v572 = vsel %vm570, %v564, %v504
      %v573 = vsel %vm569, %v567, %v505
      %v574 = vsel %vm570, %v567, %v506
      %v575 = vsel %vm569, %v503, %v563
      %v576 = vsel %vm570, %v504, %v564
      %v577 = vsel %vm569, %v505, %v567
      %v578 = vsel %vm570, %v506, %v567
      %vm579 = vcmp.lt.f32.partialorder %v575, %v513
      %vm580 = vcmp.lt.f32.partialorder %v576, %v514
      %v581 = vsel %vm579, %v575, %v513
      %v582 = vsel %vm580, %v576, %v514
      %v583 = vsel %vm579, %v577, %v515
      %v584 = vsel %vm580, %v578, %v516
      %v585 = vsel %vm579, %v513, %v575
      %v586 = vsel %vm580, %v514, %v576
      %v587 = vsel %vm579, %v515, %v577
      %v588 = vsel %vm580, %v516, %v578
      %vm589 = vcmp.lt.f32.partialorder %v585, %v523
      %vm590 = vcmp.lt.f32.partialorder %v586, %v524
      %v591 = vsel %vm589, %v585, %v523
      %v592 = vsel %vm590, %v586, %v524
      %v593 = vsel %vm589, %v587, %v525
      %v594 = vsel %vm590, %v588, %v526
      %v595 = vsel %vm589, %v523, %v585
      %v596 = vsel %vm590, %v524, %v586
      %v597 = vsel %vm589, %v525, %v587
      %v598 = vsel %vm590, %v526, %v588
      %vm599 = vcmp.lt.f32.partialorder %v595, %v533
      %vm600 = vcmp.lt.f32.partialorder %v596, %v534
      %v601 = vsel %vm599, %v595, %v533
      %v602 = vsel %vm600, %v596, %v534
      %v603 = vsel %vm599, %v597, %v535
      %v604 = vsel %vm600, %v598, %v536
      %v605 = vsel %vm599, %v533, %v595
      %v606 = vsel %vm600, %v534, %v596
      %v607 = vsel %vm599, %v535, %v597
      %v608 = vsel %vm600, %v536, %v598
      %vm609 = vcmp.lt.f32.partialorder %v605, %v543
      %vm610 = vcmp.lt.f32.partialorder %v606, %v544
      %v611 = vsel %vm609, %v605, %v543
      %v612 = vsel %vm610, %v606, %v544
      %v613 = vsel %vm609, %v607, %v545
      %v614 = vsel %vm610, %v608, %v546
      %615 = vset.pattern.permute.xlu0 7
      %616 = vperm.xlu0 %615, %v137
      %v617 = vpop.permute.xlu0 %616
      %v619 = vsub.f32 %v117, %v617
      %v620 = vsub.f32 %v121, %v617
      %621 = vset.pattern.permute.xlu0 15
      %622 = vperm.xlu0 %621, %v137
      %v623 = vpop.permute.xlu0 %622
      %v625 = vsub.f32 %v130, %v623
      %v626 = vsub.f32 %v134, %v623
      %v627 = vmul.f32 %v619, %v619
      %v628 = vmul.f32 %v620, %v620
      %v629 = vmul.f32 %v625, %v625
      %v630 = vmul.f32 %v626, %v626
      %v631 = vadd.f32 %v627, %v629
      %v632 = vadd.f32 %v628, %v630
      %633 = vset.pattern.permute.xlu0 23
      %634 = vperm.xlu0 %633, %v137
      %v635 = vpop.permute.xlu0 %634
      %vm637 = vcmp.lt.f32.partialorder %v631, %v571
      %vm638 = vcmp.lt.f32.partialorder %v632, %v572
      %v639 = vsel %vm637, %v631, %v571
      %v640 = vsel %vm638, %v632, %v572
      %v641 = vsel %vm637, %v635, %v573
      %v642 = vsel %vm638, %v635, %v574
      %v643 = vsel %vm637, %v571, %v631
      %v644 = vsel %vm638, %v572, %v632
      %v645 = vsel %vm637, %v573, %v635
      %v646 = vsel %vm638, %v574, %v635
      %vm647 = vcmp.lt.f32.partialorder %v643, %v581
      %vm648 = vcmp.lt.f32.partialorder %v644, %v582
      %v649 = vsel %vm647, %v643, %v581
      %v650 = vsel %vm648, %v644, %v582
      %v651 = vsel %vm647, %v645, %v583
      %v652 = vsel %vm648, %v646, %v584
      %v653 = vsel %vm647, %v581, %v643
      %v654 = vsel %vm648, %v582, %v644
      %v655 = vsel %vm647, %v583, %v645
      %v656 = vsel %vm648, %v584, %v646
      %vm657 = vcmp.lt.f32.partialorder %v653, %v591
      %vm658 = vcmp.lt.f32.partialorder %v654, %v592
      %v659 = vsel %vm657, %v653, %v591
      %v660 = vsel %vm658, %v654, %v592
      %v661 = vsel %vm657, %v655, %v593
      %v662 = vsel %vm658, %v656, %v594
      %v663 = vsel %vm657, %v591, %v653
      %v664 = vsel %vm658, %v592, %v654
      %v665 = vsel %vm657, %v593, %v655
      %v666 = vsel %vm658, %v594, %v656
      %vm667 = vcmp.lt.f32.partialorder %v663, %v601
      %vm668 = vcmp.lt.f32.partialorder %v664, %v602
      %v669 = vsel %vm667, %v663, %v601
      %v670 = vsel %vm668, %v664, %v602
      %v671 = vsel %vm667, %v665, %v603
      %v672 = vsel %vm668, %v666, %v604
      %v673 = vsel %vm667, %v601, %v663
      %v674 = vsel %vm668, %v602, %v664
      %v675 = vsel %vm667, %v603, %v665
      %v676 = vsel %vm668, %v604, %v666
      %vm677 = vcmp.lt.f32.partialorder %v673, %v611
      %vm678 = vcmp.lt.f32.partialorder %v674, %v612
      %v679 = vsel %vm677, %v673, %v611
      %v680 = vsel %vm678, %v674, %v612
      %v681 = vsel %vm677, %v675, %v613
      %v682 = vsel %vm678, %v676, %v614
      %v683 = vmul.f32 %v639, -0.5
      %v684 = vmul.f32 %v640, -0.5
      %v685 = vmul.f32 %v683, 1.442695
      %v686 = vpow.pop %v685
      %v687 = vmul.f32 %v684, 1.442695
      %v688 = vpow.pop %v687
      %v689 = vmul.f32 %v686, %v641
      %v690 = vmul.f32 %v688, %v642
      %v691 = vadd.f32 %v689, 0.0
      %v692 = vadd.f32 %v690, 0.0
      %v693 = vadd.f32 %v686, 0.0
      %v694 = vadd.f32 %v688, 0.0
      %v695 = vmul.f32 %v649, -0.5
      %v696 = vmul.f32 %v650, -0.5
      %v697 = vmul.f32 %v695, 1.442695
      %v698 = vpow.pop %v697
      %v699 = vmul.f32 %v696, 1.442695
      %v700 = vpow.pop %v699
      %v701 = vmul.f32 %v698, %v651
      %v702 = vmul.f32 %v700, %v652
      %v703 = vadd.f32 %v691, %v701
      %v704 = vadd.f32 %v692, %v702
      %v705 = vadd.f32 %v693, %v698
      %v706 = vadd.f32 %v694, %v700
      %v707 = vmul.f32 %v659, -0.5
      %v708 = vmul.f32 %v660, -0.5
      %v709 = vmul.f32 %v707, 1.442695
      %v710 = vpow.pop %v709
      %v711 = vmul.f32 %v708, 1.442695
      %v712 = vpow.pop %v711
      %v713 = vmul.f32 %v710, %v661
      %v714 = vmul.f32 %v712, %v662
      %v715 = vadd.f32 %v703, %v713
      %v716 = vadd.f32 %v704, %v714
      %v717 = vadd.f32 %v705, %v710
      %v718 = vadd.f32 %v706, %v712
      %v719 = vmul.f32 %v669, -0.5
      %v720 = vmul.f32 %v670, -0.5
      %v721 = vmul.f32 %v719, 1.442695
      %v722 = vpow.pop %v721
      %v723 = vmul.f32 %v720, 1.442695
      %v724 = vpow.pop %v723
      %v725 = vmul.f32 %v722, %v671
      %v726 = vmul.f32 %v724, %v672
      %v727 = vadd.f32 %v715, %v725
      %v728 = vadd.f32 %v716, %v726
      %v729 = vadd.f32 %v717, %v722
      %v730 = vadd.f32 %v718, %v724
      %v731 = vmul.f32 %v679, -0.5
      %v732 = vmul.f32 %v680, -0.5
      %v733 = vmul.f32 %v731, 1.442695
      %v734 = vpow.pop %v733
      %v735 = vmul.f32 %v732, 1.442695
      %v736 = vpow.pop %v735
      %v737 = vmul.f32 %v734, %v681
      %v738 = vmul.f32 %v736, %v682
      %v739 = vadd.f32 %v727, %v737
      %v740 = vadd.f32 %v728, %v738
      %v741 = vadd.f32 %v729, %v734
      %v742 = vadd.f32 %v730, %v736
      %v743 = vrcp.pop %v741
      %v744 = vrcp.pop %v742
      %v745 = vmul.f32 %v739, %v743
      %v746 = vmul.f32 %v740, %v744
      %s747 = smul.addr %s109, 8
      %s748 = scalar_lea.vmem [#allocation2], %s747
      %749 = vst [vmem:[%s748] sm:$0xff] %v745
      %750 = vst [vmem:[%s748 + $0x8] sm:$0xff] %v746
    $region58: #{a_call__.1} parent=1 // loop_footer
      %s107 = sadd.s32 1, %s103
    $region59: #{a_call__.1} parent=1 // loop_footer_branch
      %102 = sbr.rel target = $region55
    $region60: #{a_call__.1} parent=1 // loop_exit
      _
    %v751 = vld [vmem:[#allocation3] sm:$0xff]
    %v752 = vld [vmem:[#allocation2] sm:$0xff]
    %v753 = vld [vmem:[#allocation2 + $0x8] sm:$0xff]
    %v754 = vld [vmem:[#allocation2 + $0x10] sm:$0xff]
    %v755 = vld [vmem:[#allocation2 + $0x18] sm:$0xff]
    %v756 = vld [vmem:[#allocation2 + $0x20] sm:$0xff]
    %v757 = vld [vmem:[#allocation2 + $0x28] sm:$0xff]
    %v758 = vld [vmem:[#allocation2 + $0x30] sm:$0xff]
    %v759 = vld [vmem:[#allocation2 + $0x38] sm:$0xff]
    %v760 = vpack.c.bf16 %v752, %v752
    %v761 = vpack.c.bf16 %v753, %v753
    %v762 = vpack.c.bf16 %v754, %v754
    %v763 = vpack.c.bf16 %v755, %v755
    %v764 = vpack.c.bf16 %v756, %v756
    %v765 = vpack.c.bf16 %v757, %v757
    %v766 = vpack.c.bf16 %v758, %v758
    %v767 = vpack.c.bf16 %v759, %v759
    %v768 = vld [vmem:[#allocation10] sm:$0xf]
    %v769 = vld [vmem:[#allocation10 + $0x4] sm:$0xf]
    %v770 = vld [vmem:[#allocation10 + $0x8] sm:$0xf]
    %v771 = vld [vmem:[#allocation10 + $0xc] sm:$0xf]
    %v772 = vld [vmem:[#allocation10 + $0x10] sm:$0xf]
    %v773 = vld [vmem:[#allocation10 + $0x14] sm:$0xf]
    %v774 = vld [vmem:[#allocation10 + $0x18] sm:$0xf]
    %v775 = vld [vmem:[#allocation10 + $0x1c] sm:$0xf]
    %v776 = vld [vmem:[#allocation10 + $0x20] sm:$0xf]
    %v777 = vld [vmem:[#allocation10 + $0x24] sm:$0xf]
    %v778 = vld [vmem:[#allocation10 + $0x28] sm:$0xf]
    %v779 = vld [vmem:[#allocation10 + $0x2c] sm:$0xf]
    %v780 = vld [vmem:[#allocation10 + $0x30] sm:$0xf]
    %v781 = vld [vmem:[#allocation10 + $0x34] sm:$0xf]
    %v782 = vld [vmem:[#allocation10 + $0x38] sm:$0xf]
    %v783 = vld [vmem:[#allocation10 + $0x3c] sm:$0xf]
    %v784 = vld [vmem:[#allocation10 + $0x40] sm:$0xf]
    %v785 = vld [vmem:[#allocation10 + $0x44] sm:$0xf]
    %v786 = vld [vmem:[#allocation10 + $0x48] sm:$0xf]
    %v787 = vld [vmem:[#allocation10 + $0x4c] sm:$0xf]
    %v788 = vld [vmem:[#allocation10 + $0x50] sm:$0xf]
    %v789 = vld [vmem:[#allocation10 + $0x54] sm:$0xf]
    %v790 = vld [vmem:[#allocation10 + $0x58] sm:$0xf]
    %v791 = vld [vmem:[#allocation10 + $0x5c] sm:$0xf]
    %v792 = vld [vmem:[#allocation10 + $0x60] sm:$0xf]
    %v793 = vld [vmem:[#allocation10 + $0x64] sm:$0xf]
    %v794 = vld [vmem:[#allocation10 + $0x68] sm:$0xf]
    %v795 = vld [vmem:[#allocation10 + $0x6c] sm:$0xf]
    %v796 = vld [vmem:[#allocation10 + $0x70] sm:$0xf]
    %v797 = vld [vmem:[#allocation10 + $0x74] sm:$0xf]
    %v798 = vld [vmem:[#allocation10 + $0x78] sm:$0xf]
    %v799 = vld [vmem:[#allocation10 + $0x7c] sm:$0xf]
    %v800 = vld [vmem:[#allocation10 + $0x80] sm:$0xf]
    %v801 = vld [vmem:[#allocation10 + $0x84] sm:$0xf]
    %v802 = vld [vmem:[#allocation10 + $0x88] sm:$0xf]
    %v803 = vld [vmem:[#allocation10 + $0x8c] sm:$0xf]
    %v804 = vld [vmem:[#allocation10 + $0x90] sm:$0xf]
    %v805 = vld [vmem:[#allocation10 + $0x94] sm:$0xf]
    %v806 = vld [vmem:[#allocation10 + $0x98] sm:$0xf]
    %v807 = vld [vmem:[#allocation10 + $0x9c] sm:$0xf]
    %v808 = vld [vmem:[#allocation10 + $0xa0] sm:$0xf]
    %v809 = vld [vmem:[#allocation10 + $0xa4] sm:$0xf]
    %v810 = vld [vmem:[#allocation10 + $0xa8] sm:$0xf]
    %v811 = vld [vmem:[#allocation10 + $0xac] sm:$0xf]
    %v812 = vld [vmem:[#allocation10 + $0xb0] sm:$0xf]
    %v813 = vld [vmem:[#allocation10 + $0xb4] sm:$0xf]
    %v814 = vld [vmem:[#allocation10 + $0xb8] sm:$0xf]
    %v815 = vld [vmem:[#allocation10 + $0xbc] sm:$0xf]
    %v816 = vld [vmem:[#allocation10 + $0xc0] sm:$0xf]
    %v817 = vld [vmem:[#allocation10 + $0xc4] sm:$0xf]
    %v818 = vld [vmem:[#allocation10 + $0xc8] sm:$0xf]
    %v819 = vld [vmem:[#allocation10 + $0xcc] sm:$0xf]
    %v820 = vld [vmem:[#allocation10 + $0xd0] sm:$0xf]
    %v821 = vld [vmem:[#allocation10 + $0xd4] sm:$0xf]
    %v822 = vld [vmem:[#allocation10 + $0xd8] sm:$0xf]
    %v823 = vld [vmem:[#allocation10 + $0xdc] sm:$0xf]
    %v824 = vld [vmem:[#allocation10 + $0xe0] sm:$0xf]
    %v825 = vld [vmem:[#allocation10 + $0xe4] sm:$0xf]
    %v826 = vld [vmem:[#allocation10 + $0xe8] sm:$0xf]
    %v827 = vld [vmem:[#allocation10 + $0xec] sm:$0xf]
    %v828 = vld [vmem:[#allocation10 + $0xf0] sm:$0xf]
    %v829 = vld [vmem:[#allocation10 + $0xf4] sm:$0xf]
    %v830 = vld [vmem:[#allocation10 + $0xf8] sm:$0xf]
    %v831 = vld [vmem:[#allocation10 + $0xfc] sm:$0xf]
    %v832 = vld [vmem:[#allocation10 + $0x100] sm:$0xf]
    %v833 = vld [vmem:[#allocation10 + $0x104] sm:$0xf]
    %v834 = vld [vmem:[#allocation10 + $0x108] sm:$0xf]
    %v835 = vld [vmem:[#allocation10 + $0x10c] sm:$0xf]
    %v836 = vld [vmem:[#allocation10 + $0x110] sm:$0xf]
    %v837 = vld [vmem:[#allocation10 + $0x114] sm:$0xf]
    %v838 = vld [vmem:[#allocation10 + $0x118] sm:$0xf]
    %v839 = vld [vmem:[#allocation10 + $0x11c] sm:$0xf]
    %v840 = vld [vmem:[#allocation10 + $0x120] sm:$0xf]
    %v841 = vld [vmem:[#allocation10 + $0x124] sm:$0xf]
    %v842 = vld [vmem:[#allocation10 + $0x128] sm:$0xf]
    %v843 = vld [vmem:[#allocation10 + $0x12c] sm:$0xf]
    %v844 = vld [vmem:[#allocation10 + $0x130] sm:$0xf]
    %v845 = vld [vmem:[#allocation10 + $0x134] sm:$0xf]
    %v846 = vld [vmem:[#allocation10 + $0x138] sm:$0xf]
    %v847 = vld [vmem:[#allocation10 + $0x13c] sm:$0xf]
    %v848 = vld [vmem:[#allocation10 + $0x140] sm:$0xf]
    %v849 = vld [vmem:[#allocation10 + $0x144] sm:$0xf]
    %v850 = vld [vmem:[#allocation10 + $0x148] sm:$0xf]
    %v851 = vld [vmem:[#allocation10 + $0x14c] sm:$0xf]
    %v852 = vld [vmem:[#allocation10 + $0x150] sm:$0xf]
    %v853 = vld [vmem:[#allocation10 + $0x154] sm:$0xf]
    %v854 = vld [vmem:[#allocation10 + $0x158] sm:$0xf]
    %v855 = vld [vmem:[#allocation10 + $0x15c] sm:$0xf]
    %v856 = vld [vmem:[#allocation10 + $0x160] sm:$0xf]
    %v857 = vld [vmem:[#allocation10 + $0x164] sm:$0xf]
    %v858 = vld [vmem:[#allocation10 + $0x168] sm:$0xf]
    %v859 = vld [vmem:[#allocation10 + $0x16c] sm:$0xf]
    %v860 = vld [vmem:[#allocation10 + $0x170] sm:$0xf]
    %v861 = vld [vmem:[#allocation10 + $0x174] sm:$0xf]
    %v862 = vld [vmem:[#allocation10 + $0x178] sm:$0xf]
    %v863 = vld [vmem:[#allocation10 + $0x17c] sm:$0xf]
    %v864 = vld [vmem:[#allocation10 + $0x180] sm:$0xf]
    %v865 = vld [vmem:[#allocation10 + $0x184] sm:$0xf]
    %v866 = vld [vmem:[#allocation10 + $0x188] sm:$0xf]
    %v867 = vld [vmem:[#allocation10 + $0x18c] sm:$0xf]
    %v868 = vld [vmem:[#allocation10 + $0x190] sm:$0xf]
    %v869 = vld [vmem:[#allocation10 + $0x194] sm:$0xf]
    %v870 = vld [vmem:[#allocation10 + $0x198] sm:$0xf]
    %v871 = vld [vmem:[#allocation10 + $0x19c] sm:$0xf]
    %v872 = vld [vmem:[#allocation10 + $0x1a0] sm:$0xf]
    %v873 = vld [vmem:[#allocation10 + $0x1a4] sm:$0xf]
    %v874 = vld [vmem:[#allocation10 + $0x1a8] sm:$0xf]
    %v875 = vld [vmem:[#allocation10 + $0x1ac] sm:$0xf]
    %v876 = vld [vmem:[#allocation10 + $0x1b0] sm:$0xf]
    %v877 = vld [vmem:[#allocation10 + $0x1b4] sm:$0xf]
    %v878 = vld [vmem:[#allocation10 + $0x1b8] sm:$0xf]
    %v879 = vld [vmem:[#allocation10 + $0x1bc] sm:$0xf]
    %v880 = vld [vmem:[#allocation10 + $0x1c0] sm:$0xf]
    %v881 = vld [vmem:[#allocation10 + $0x1c4] sm:$0xf]
    %v882 = vld [vmem:[#allocation10 + $0x1c8] sm:$0xf]
    %v883 = vld [vmem:[#allocation10 + $0x1cc] sm:$0xf]
    %v884 = vld [vmem:[#allocation10 + $0x1d0] sm:$0xf]
    %v885 = vld [vmem:[#allocation10 + $0x1d4] sm:$0xf]
    %v886 = vld [vmem:[#allocation10 + $0x1d8] sm:$0xf]
    %v887 = vld [vmem:[#allocation10 + $0x1dc] sm:$0xf]
    %v888 = vld [vmem:[#allocation10 + $0x1e0] sm:$0xf]
    %v889 = vld [vmem:[#allocation10 + $0x1e4] sm:$0xf]
    %v890 = vld [vmem:[#allocation10 + $0x1e8] sm:$0xf]
    %v891 = vld [vmem:[#allocation10 + $0x1ec] sm:$0xf]
    %v892 = vld [vmem:[#allocation10 + $0x1f0] sm:$0xf]
    %v893 = vld [vmem:[#allocation10 + $0x1f4] sm:$0xf]
    %v894 = vld [vmem:[#allocation10 + $0x1f8] sm:$0xf]
    %v895 = vld [vmem:[#allocation10 + $0x1fc] sm:$0xf]
    %v1024 = vunpack.c.l.b16 %v768
    %v1025 = vunpack.c.l.b16 %v769
    %v1026 = vunpack.c.l.b16 %v770
    %v1027 = vunpack.c.l.b16 %v771
    %v1028 = vunpack.c.l.b16 %v772
    %v1029 = vunpack.c.l.b16 %v773
    %v1030 = vunpack.c.l.b16 %v774
    %v1031 = vunpack.c.l.b16 %v775
    %v1032 = vunpack.c.l.b16 %v776
    %v1033 = vunpack.c.l.b16 %v777
    %v1034 = vunpack.c.l.b16 %v778
    %v1035 = vunpack.c.l.b16 %v779
    %v1036 = vunpack.c.l.b16 %v780
    %v1037 = vunpack.c.l.b16 %v781
    %v1038 = vunpack.c.l.b16 %v782
    %v1039 = vunpack.c.l.b16 %v783
    %v1040 = vunpack.c.l.b16 %v784
    %v1041 = vunpack.c.l.b16 %v785
    %v1042 = vunpack.c.l.b16 %v786
    %v1043 = vunpack.c.l.b16 %v787
    %v1044 = vunpack.c.l.b16 %v788
    %v1045 = vunpack.c.l.b16 %v789
    %v1046 = vunpack.c.l.b16 %v790
    %v1047 = vunpack.c.l.b16 %v791
    %v1048 = vunpack.c.l.b16 %v792
    %v1049 = vunpack.c.l.b16 %v793
    %v1050 = vunpack.c.l.b16 %v794
    %v1051 = vunpack.c.l.b16 %v795
    %v1052 = vunpack.c.l.b16 %v796
    %v1053 = vunpack.c.l.b16 %v797
    %v1054 = vunpack.c.l.b16 %v798
    %v1055 = vunpack.c.l.b16 %v799
    %v1056 = vunpack.c.l.b16 %v800
    %v1057 = vunpack.c.l.b16 %v801
    %v1058 = vunpack.c.l.b16 %v802
    %v1059 = vunpack.c.l.b16 %v803
    %v1060 = vunpack.c.l.b16 %v804
    %v1061 = vunpack.c.l.b16 %v805
    %v1062 = vunpack.c.l.b16 %v806
    %v1063 = vunpack.c.l.b16 %v807
    %v1064 = vunpack.c.l.b16 %v808
    %v1065 = vunpack.c.l.b16 %v809
    %v1066 = vunpack.c.l.b16 %v810
    %v1067 = vunpack.c.l.b16 %v811
    %v1068 = vunpack.c.l.b16 %v812
    %v1069 = vunpack.c.l.b16 %v813
    %v1070 = vunpack.c.l.b16 %v814
    %v1071 = vunpack.c.l.b16 %v815
    %v1072 = vunpack.c.l.b16 %v816
    %v1073 = vunpack.c.l.b16 %v817
    %v1074 = vunpack.c.l.b16 %v818
    %v1075 = vunpack.c.l.b16 %v819
    %v1076 = vunpack.c.l.b16 %v820
    %v1077 = vunpack.c.l.b16 %v821
    %v1078 = vunpack.c.l.b16 %v822
    %v1079 = vunpack.c.l.b16 %v823
    %v1080 = vunpack.c.l.b16 %v824
    %v1081 = vunpack.c.l.b16 %v825
    %v1082 = vunpack.c.l.b16 %v826
    %v1083 = vunpack.c.l.b16 %v827
    %v1084 = vunpack.c.l.b16 %v828
    %v1085 = vunpack.c.l.b16 %v829
    %v1086 = vunpack.c.l.b16 %v830
    %v1087 = vunpack.c.l.b16 %v831
    %v1088 = vunpack.c.l.b16 %v832
    %v1089 = vunpack.c.l.b16 %v833
    %v1090 = vunpack.c.l.b16 %v834
    %v1091 = vunpack.c.l.b16 %v835
    %v1092 = vunpack.c.l.b16 %v836
    %v1093 = vunpack.c.l.b16 %v837
    %v1094 = vunpack.c.l.b16 %v838
    %v1095 = vunpack.c.l.b16 %v839
    %v1096 = vunpack.c.l.b16 %v840
    %v1097 = vunpack.c.l.b16 %v841
    %v1098 = vunpack.c.l.b16 %v842
    %v1099 = vunpack.c.l.b16 %v843
    %v1100 = vunpack.c.l.b16 %v844
    %v1101 = vunpack.c.l.b16 %v845
    %v1102 = vunpack.c.l.b16 %v846
    %v1103 = vunpack.c.l.b16 %v847
    %v1104 = vunpack.c.l.b16 %v848
    %v1105 = vunpack.c.l.b16 %v849
    %v1106 = vunpack.c.l.b16 %v850
    %v1107 = vunpack.c.l.b16 %v851
    %v1108 = vunpack.c.l.b16 %v852
    %v1109 = vunpack.c.l.b16 %v853
    %v1110 = vunpack.c.l.b16 %v854
    %v1111 = vunpack.c.l.b16 %v855
    %v1112 = vunpack.c.l.b16 %v856
    %v1113 = vunpack.c.l.b16 %v857
    %v1114 = vunpack.c.l.b16 %v858
    %v1115 = vunpack.c.l.b16 %v859
    %v1116 = vunpack.c.l.b16 %v860
    %v1117 = vunpack.c.l.b16 %v861
    %v1118 = vunpack.c.l.b16 %v862
    %v1119 = vunpack.c.l.b16 %v863
    %v1120 = vunpack.c.l.b16 %v864
    %v1121 = vunpack.c.l.b16 %v865
    %v1122 = vunpack.c.l.b16 %v866
    %v1123 = vunpack.c.l.b16 %v867
    %v1124 = vunpack.c.l.b16 %v868
    %v1125 = vunpack.c.l.b16 %v869
    %v1126 = vunpack.c.l.b16 %v870
    %v1127 = vunpack.c.l.b16 %v871
    %v1128 = vunpack.c.l.b16 %v872
    %v1129 = vunpack.c.l.b16 %v873
    %v1130 = vunpack.c.l.b16 %v874
    %v1131 = vunpack.c.l.b16 %v875
    %v1132 = vunpack.c.l.b16 %v876
    %v1133 = vunpack.c.l.b16 %v877
    %v1134 = vunpack.c.l.b16 %v878
    %v1135 = vunpack.c.l.b16 %v879
    %v1136 = vunpack.c.l.b16 %v880
    %v1137 = vunpack.c.l.b16 %v881
    %v1138 = vunpack.c.l.b16 %v882
    %v1139 = vunpack.c.l.b16 %v883
    %v1140 = vunpack.c.l.b16 %v884
    %v1141 = vunpack.c.l.b16 %v885
    %v1142 = vunpack.c.l.b16 %v886
    %v1143 = vunpack.c.l.b16 %v887
    %v1144 = vunpack.c.l.b16 %v888
    %v1145 = vunpack.c.l.b16 %v889
    %v1146 = vunpack.c.l.b16 %v890
    %v1147 = vunpack.c.l.b16 %v891
    %v1148 = vunpack.c.l.b16 %v892
    %v1149 = vunpack.c.l.b16 %v893
    %v1150 = vunpack.c.l.b16 %v894
    %v1151 = vunpack.c.l.b16 %v895
    %v1152 = vpack.c.b16 %v1025, %v1024
    %v1153 = vpack.c.b16 %v1027, %v1026
    %v1154 = vpack.c.b16 %v1029, %v1028
    %v1155 = vpack.c.b16 %v1031, %v1030
    %v1156 = vpack.c.b16 %v1033, %v1032
    %v1157 = vpack.c.b16 %v1035, %v1034
    %v1158 = vpack.c.b16 %v1037, %v1036
    %v1159 = vpack.c.b16 %v1039, %v1038
    %v1160 = vpack.c.b16 %v1041, %v1040
    %v1161 = vpack.c.b16 %v1043, %v1042
    %v1162 = vpack.c.b16 %v1045, %v1044
    %v1163 = vpack.c.b16 %v1047, %v1046
    %v1164 = vpack.c.b16 %v1049, %v1048
    %v1165 = vpack.c.b16 %v1051, %v1050
    %v1166 = vpack.c.b16 %v1053, %v1052
    %v1167 = vpack.c.b16 %v1055, %v1054
    %v1168 = vpack.c.b16 %v1057, %v1056
    %v1169 = vpack.c.b16 %v1059, %v1058
    %v1170 = vpack.c.b16 %v1061, %v1060
    %v1171 = vpack.c.b16 %v1063, %v1062
    %v1172 = vpack.c.b16 %v1065, %v1064
    %v1173 = vpack.c.b16 %v1067, %v1066
    %v1174 = vpack.c.b16 %v1069, %v1068
    %v1175 = vpack.c.b16 %v1071, %v1070
    %v1176 = vpack.c.b16 %v1073, %v1072
    %v1177 = vpack.c.b16 %v1075, %v1074
    %v1178 = vpack.c.b16 %v1077, %v1076
    %v1179 = vpack.c.b16 %v1079, %v1078
    %v1180 = vpack.c.b16 %v1081, %v1080
    %v1181 = vpack.c.b16 %v1083, %v1082
    %v1182 = vpack.c.b16 %v1085, %v1084
    %v1183 = vpack.c.b16 %v1087, %v1086
    %v1184 = vpack.c.b16 %v1089, %v1088
    %v1185 = vpack.c.b16 %v1091, %v1090
    %v1186 = vpack.c.b16 %v1093, %v1092
    %v1187 = vpack.c.b16 %v1095, %v1094
    %v1188 = vpack.c.b16 %v1097, %v1096
    %v1189 = vpack.c.b16 %v1099, %v1098
    %v1190 = vpack.c.b16 %v1101, %v1100
    %v1191 = vpack.c.b16 %v1103, %v1102
    %v1192 = vpack.c.b16 %v1105, %v1104
    %v1193 = vpack.c.b16 %v1107, %v1106
    %v1194 = vpack.c.b16 %v1109, %v1108
    %v1195 = vpack.c.b16 %v1111, %v1110
    %v1196 = vpack.c.b16 %v1113, %v1112
    %v1197 = vpack.c.b16 %v1115, %v1114
    %v1198 = vpack.c.b16 %v1117, %v1116
    %v1199 = vpack.c.b16 %v1119, %v1118
    %v1200 = vpack.c.b16 %v1121, %v1120
    %v1201 = vpack.c.b16 %v1123, %v1122
    %v1202 = vpack.c.b16 %v1125, %v1124
    %v1203 = vpack.c.b16 %v1127, %v1126
    %v1204 = vpack.c.b16 %v1129, %v1128
    %v1205 = vpack.c.b16 %v1131, %v1130
    %v1206 = vpack.c.b16 %v1133, %v1132
    %v1207 = vpack.c.b16 %v1135, %v1134
    %v1208 = vpack.c.b16 %v1137, %v1136
    %v1209 = vpack.c.b16 %v1139, %v1138
    %v1210 = vpack.c.b16 %v1141, %v1140
    %v1211 = vpack.c.b16 %v1143, %v1142
    %v1212 = vpack.c.b16 %v1145, %v1144
    %v1213 = vpack.c.b16 %v1147, %v1146
    %v1214 = vpack.c.b16 %v1149, %v1148
    %v1215 = vpack.c.b16 %v1151, %v1150
    %1280 = vmatprep.subr.bf16.mxu0 0
    %1281 = vmatpush1.bf16.msra.mxu0 %v1152
    %1282 = vmatprep.subr.bf16.mxu0 0
    %1283 = vmatpush1.bf16.msra.mxu0 %v1153
    %1284 = vmatprep.subr.bf16.mxu0 0
    %1285 = vmatpush1.bf16.msra.mxu0 %v1154
    %1286 = vmatprep.subr.bf16.mxu0 0
    %1287 = vmatpush1.bf16.msra.mxu0 %v1155
    %1288 = vmatprep.subr.bf16.mxu0 0
    %1289 = vmatpush1.bf16.msra.mxu0 %v1156
    %1290 = vmatprep.subr.bf16.mxu0 0
    %1291 = vmatpush1.bf16.msra.mxu0 %v1157
    %1292 = vmatprep.subr.bf16.mxu0 0
    %1293 = vmatpush1.bf16.msra.mxu0 %v1158
    %1294 = vmatprep.subr.bf16.mxu0 0
    %1295 = vmatpush1.bf16.msra.mxu0 %v1159
    %1296 = vmatprep.subr.bf16.mxu0 0
    %1297 = vmatpush1.bf16.msra.mxu0 %v1160
    %1298 = vmatprep.subr.bf16.mxu0 0
    %1299 = vmatpush1.bf16.msra.mxu0 %v1161
    %1300 = vmatprep.subr.bf16.mxu0 0
    %1301 = vmatpush1.bf16.msra.mxu0 %v1162
    %1302 = vmatprep.subr.bf16.mxu0 0
    %1303 = vmatpush1.bf16.msra.mxu0 %v1163
    %1304 = vmatprep.subr.bf16.mxu0 0
    %1305 = vmatpush1.bf16.msra.mxu0 %v1164
    %1306 = vmatprep.subr.bf16.mxu0 0
    %1307 = vmatpush1.bf16.msra.mxu0 %v1165
    %1308 = vmatprep.subr.bf16.mxu0 0
    %1309 = vmatpush1.bf16.msra.mxu0 %v1166
    %1310 = vmatprep.subr.bf16.mxu0 0
    %1311 = vmatpush1.bf16.msra.mxu0 %v1167
    %1312 = vmatprep.mubr.bf16.mxu0 %v761
    %1313 = vmatmul.mubr.bf16.gmra.mrb[0].mxu0 %v760
    %v1314 = vpop.f32.mrb[0].mxu0
    %v1315 = vadd.f32 0.0, %v1314
    %v1316 = vpop.f32.mrb[0].mxu0
    %v1317 = vpop.f32.mrb[0].mxu0
    %v1318 = vpop.f32.mrb[0].mxu0
    %1319 = vdwg.mxu0
    %1320 = vmatprep.subr.bf16.mxu0 0
    %1321 = vmatpush1.bf16.msra.mxu0 %v1168
    %1322 = vmatprep.subr.bf16.mxu0 0
    %1323 = vmatpush1.bf16.msra.mxu0 %v1169
    %1324 = vmatprep.subr.bf16.mxu0 0
    %1325 = vmatpush1.bf16.msra.mxu0 %v1170
    %1326 = vmatprep.subr.bf16.mxu0 0
    %1327 = vmatpush1.bf16.msra.mxu0 %v1171
    %1328 = vmatprep.subr.bf16.mxu0 0
    %1329 = vmatpush1.bf16.msra.mxu0 %v1172
    %1330 = vmatprep.subr.bf16.mxu0 0
    %1331 = vmatpush1.bf16.msra.mxu0 %v1173
    %1332 = vmatprep.subr.bf16.mxu0 0
    %1333 = vmatpush1.bf16.msra.mxu0 %v1174
    %1334 = vmatprep.subr.bf16.mxu0 0
    %1335 = vmatpush1.bf16.msra.mxu0 %v1175
    %1336 = vmatprep.subr.bf16.mxu0 0
    %1337 = vmatpush1.bf16.msra.mxu0 %v1176
    %1338 = vmatprep.subr.bf16.mxu0 0
    %1339 = vmatpush1.bf16.msra.mxu0 %v1177
    %1340 = vmatprep.subr.bf16.mxu0 0
    %1341 = vmatpush1.bf16.msra.mxu0 %v1178
    %1342 = vmatprep.subr.bf16.mxu0 0
    %1343 = vmatpush1.bf16.msra.mxu0 %v1179
    %1344 = vmatprep.subr.bf16.mxu0 0
    %1345 = vmatpush1.bf16.msra.mxu0 %v1180
    %1346 = vmatprep.subr.bf16.mxu0 0
    %1347 = vmatpush1.bf16.msra.mxu0 %v1181
    %1348 = vmatprep.subr.bf16.mxu0 0
    %1349 = vmatpush1.bf16.msra.mxu0 %v1182
    %1350 = vmatprep.subr.bf16.mxu0 0
    %1351 = vmatpush1.bf16.msra.mxu0 %v1183
    %1352 = vmatprep.mubr.bf16.mxu0 %v763
    %1353 = vmatmul.mubr.bf16.gmra.mrb[0].mxu0 %v762
    %v1354 = vpop.f32.mrb[0].mxu0
    %v1355 = vadd.f32 %v1315, %v1354
    %v1356 = vpop.f32.mrb[0].mxu0
    %v1357 = vpop.f32.mrb[0].mxu0
    %v1358 = vpop.f32.mrb[0].mxu0
    %1359 = vdwg.mxu0
    %1360 = vmatprep.subr.bf16.mxu0 0
    %1361 = vmatpush1.bf16.msra.mxu0 %v1184
    %1362 = vmatprep.subr.bf16.mxu0 0
    %1363 = vmatpush1.bf16.msra.mxu0 %v1185
    %1364 = vmatprep.subr.bf16.mxu0 0
    %1365 = vmatpush1.bf16.msra.mxu0 %v1186
    %1366 = vmatprep.subr.bf16.mxu0 0
    %1367 = vmatpush1.bf16.msra.mxu0 %v1187
    %1368 = vmatprep.subr.bf16.mxu0 0
    %1369 = vmatpush1.bf16.msra.mxu0 %v1188
    %1370 = vmatprep.subr.bf16.mxu0 0
    %1371 = vmatpush1.bf16.msra.mxu0 %v1189
    %1372 = vmatprep.subr.bf16.mxu0 0
    %1373 = vmatpush1.bf16.msra.mxu0 %v1190
    %1374 = vmatprep.subr.bf16.mxu0 0
    %1375 = vmatpush1.bf16.msra.mxu0 %v1191
    %1376 = vmatprep.subr.bf16.mxu0 0
    %1377 = vmatpush1.bf16.msra.mxu0 %v1192
    %1378 = vmatprep.subr.bf16.mxu0 0
    %1379 = vmatpush1.bf16.msra.mxu0 %v1193
    %1380 = vmatprep.subr.bf16.mxu0 0
    %1381 = vmatpush1.bf16.msra.mxu0 %v1194
    %1382 = vmatprep.subr.bf16.mxu0 0
    %1383 = vmatpush1.bf16.msra.mxu0 %v1195
    %1384 = vmatprep.subr.bf16.mxu0 0
    %1385 = vmatpush1.bf16.msra.mxu0 %v1196
    %1386 = vmatprep.subr.bf16.mxu0 0
    %1387 = vmatpush1.bf16.msra.mxu0 %v1197
    %1388 = vmatprep.subr.bf16.mxu0 0
    %1389 = vmatpush1.bf16.msra.mxu0 %v1198
    %1390 = vmatprep.subr.bf16.mxu0 0
    %1391 = vmatpush1.bf16.msra.mxu0 %v1199
    %1392 = vmatprep.mubr.bf16.mxu0 %v765
    %1393 = vmatmul.mubr.bf16.gmra.mrb[0].mxu0 %v764
    %v1394 = vpop.f32.mrb[0].mxu0
    %v1395 = vadd.f32 %v1355, %v1394
    %v1396 = vpop.f32.mrb[0].mxu0
    %v1397 = vpop.f32.mrb[0].mxu0
    %v1398 = vpop.f32.mrb[0].mxu0
    %1399 = vdwg.mxu0
    %1400 = vmatprep.subr.bf16.mxu0 0
    %1401 = vmatpush1.bf16.msra.mxu0 %v1200
    %1402 = vmatprep.subr.bf16.mxu0 0
    %1403 = vmatpush1.bf16.msra.mxu0 %v1201
    %1404 = vmatprep.subr.bf16.mxu0 0
    %1405 = vmatpush1.bf16.msra.mxu0 %v1202
    %1406 = vmatprep.subr.bf16.mxu0 0
    %1407 = vmatpush1.bf16.msra.mxu0 %v1203
    %1408 = vmatprep.subr.bf16.mxu0 0
    %1409 = vmatpush1.bf16.msra.mxu0 %v1204
    %1410 = vmatprep.subr.bf16.mxu0 0
    %1411 = vmatpush1.bf16.msra.mxu0 %v1205
    %1412 = vmatprep.subr.bf16.mxu0 0
    %1413 = vmatpush1.bf16.msra.mxu0 %v1206
    %1414 = vmatprep.subr.bf16.mxu0 0
    %1415 = vmatpush1.bf16.msra.mxu0 %v1207
    %1416 = vmatprep.subr.bf16.mxu0 0
    %1417 = vmatpush1.bf16.msra.mxu0 %v1208
    %1418 = vmatprep.subr.bf16.mxu0 0
    %1419 = vmatpush1.bf16.msra.mxu0 %v1209
    %1420 = vmatprep.subr.bf16.mxu0 0
    %1421 = vmatpush1.bf16.msra.mxu0 %v1210
    %1422 = vmatprep.subr.bf16.mxu0 0
    %1423 = vmatpush1.bf16.msra.mxu0 %v1211
    %1424 = vmatprep.subr.bf16.mxu0 0
    %1425 = vmatpush1.bf16.msra.mxu0 %v1212
    %1426 = vmatprep.subr.bf16.mxu0 0
    %1427 = vmatpush1.bf16.msra.mxu0 %v1213
    %1428 = vmatprep.subr.bf16.mxu0 0
    %1429 = vmatpush1.bf16.msra.mxu0 %v1214
    %1430 = vmatprep.subr.bf16.mxu0 0
    %1431 = vmatpush1.bf16.msra.mxu0 %v1215
    %1432 = vmatprep.mubr.bf16.mxu0 %v767
    %1433 = vmatmul.mubr.bf16.gmra.mrb[0].mxu0 %v766
    %v1434 = vpop.f32.mrb[0].mxu0
    %v1435 = vadd.f32 %v1395, %v1434
    %v1436 = vpop.f32.mrb[0].mxu0
    %v1437 = vpop.f32.mrb[0].mxu0
    %v1438 = vpop.f32.mrb[0].mxu0
    %1439 = vdwg.mxu0
    %v1440 = vadd.f32 %v751, %v1435
    %1441 = vst [vmem:[#allocation3] sm:$0xff] %v1440
    // Predicated region
    $region61: #{a_call__.1} parent=1 // pred_check
      %p1442 = pneg %p97
    $region62: #{a_call__.1} parent=1 // pred_check_branch
      %1444 = sbr.rel (%p1442) target = $region64
    $region63: #{a_call__.1} parent=1 // pred_region
      %v1445 = vld [vmem:[#allocation3] sm:$0xff]
      %v1446 = vld [vmem:[#allocation12] sm:$0xff]
      %v1447 = vsub.f32 %v1445, %v1446
      %v1448 = vmul.f32 %v1447, %v1447
      %v1449 = vld [vmem:[#allocation13] sm:$0x1]
      %v1451 = vlaneseq
      %v1452 = vshrl.u32 %v1451, 7
      %v1453 = vsub.s32 0, %v1452
      %v1454 = vrot.slane %v1449, %v1453
      %v1456 = vmul.f32 %v1448, %v1454
      %1457 = vst [vmem:[#allocation15] sm:$0xff] %v1456
    $region64: #{a_call__.1} parent=1 // pred_fallthru
      _
    // Predicated region
    $region65: #{a_call__.1} parent=1 // pred_check
      _
    $region66: #{a_call__.1} parent=1 // pred_check_branch
      %1459 = sbr.rel (0) target = $region68
    $region67: #{a_call__.1} parent=1 // pred_region
      %s1461 = ssub.s32 128, 128
      %1462 = vsyncadd [#allocation6], %s1461
      %s1464 = sshll.u32 [#allocation15], 4
      %s1465 = int_to_ptr.vmem [resolvable:$true] %s1464
      %1467 = dma.vmem_to_hbm [thread:$0]  %s1465, 128, %s6, [#allocation6]
    $region68: #{a_call__.1} parent=1 // pred_fallthru
      _
    // Predicated region
    $region69: #{a_call__.1} parent=1 // pred_check
      _
    $region70: #{a_call__.1} parent=1 // pred_check_branch
      %1469 = sbr.rel (0) target = $region72
    $region71: #{a_call__.1} parent=1 // pred_region
      %1470 = dma.done [#allocation6], 128
    $region72: #{a_call__.1} parent=1 // pred_fallthru
      _
    %1471 = vsyncpa [#allocation5], 1
    %1472 = vsyncpa [#allocation8], 1
    %1473 = vsyncpa [#allocation11], 1
    %1474 = vsyncpa [#allocation14], 1
    %1475 = vsyncpa [#allocation6], 1

</llo_original>
